<compile_context>
chip_gen: v7x
topology: tpu7x:2x2x1
jax: 0.10.0
libtpu: 0.0.40
codegen_flags: <defaults>
</compile_context>

<pallas_src>
import jax
import jax.numpy as jnp
from jax import lax
from jax.experimental import pallas as pl
from jax.experimental.pallas import tpu as pltpu


# ----------------------------------------------------------------------------
# Tile selection: lane-dense key/output tile (multiple of 128 dividing HW),
# otherwise the full HW (small feature maps, e.g. 8x8).
# ----------------------------------------------------------------------------
def _pick_key_tile(hw):
    for t in (256, 128):
        if hw % t == 0:
            return t
    return hw


# ----------------------------------------------------------------------------
# Fused kernel: grid = (batch, key-tile).  One batch element's q/k/v projection
# runs once (key-tile 0) into VMEM scratch; every key tile then computes its
# (HW, Tj) energy slab, query-axis softmax, v @ p, and the residual epilogue.
# ----------------------------------------------------------------------------
def _build_kernel(C8, Tj):
    def kernel(x_ref, w_ref, b_ref, gamma_ref, o_ref, q_scr, k_scr, v_scr):
        j = pl.program_id(1)

        # ---- fused q/k/v projection, once per batch element --------------
        @pl.when(j == 0)
        def _():
            xb = x_ref[0].astype(jnp.bfloat16)                        # (C, HW)
            proj = jnp.dot(w_ref[...], xb,
                           preferred_element_type=jnp.float32)        # (Ctot, HW)
            proj = proj + b_ref[...]                                  # fp32 bias
            q_scr[...] = proj[:C8, :].astype(jnp.bfloat16)            # (C8, HW)
            k_scr[...] = proj[C8:2 * C8, :].astype(jnp.bfloat16)      # (C8, HW)
            v_scr[...] = proj[2 * C8:, :].astype(jnp.bfloat16)        # (C,  HW)

        jstart = pl.multiple_of(j * Tj, Tj)
        k_tile = k_scr[:, pl.ds(jstart, Tj)]                          # (C8, Tj)

        # energy e[i, jt] = q_i . k_j : query axis i on sublanes, keys on lanes
        e = lax.dot_general(q_scr[...], k_tile,
                            dimension_numbers=(((0,), (0,)), ((), ())),
                            preferred_element_type=jnp.float32)       # (HW, Tj)

        # torch F.softmax(query_key, dim=1): normalize over the query axis i,
        # which is fully present in every key tile (no online softmax needed).
        m = jnp.max(e, axis=0, keepdims=True)                         # (1, Tj)
        p = jnp.exp(e - m)                                            # EUP slot
        denom = jnp.sum(p, axis=0, keepdims=True)
        p = (p * pl.reciprocal(denom, approx=False)).astype(jnp.bfloat16)

        # out[c, jt] = sum_i v[c, i] * attn[i, jt]  -> plain MXU matmul.
        attn = jnp.dot(v_scr[...], p,
                       preferred_element_type=jnp.float32)            # (C, Tj)

        gamma = gamma_ref[0]                                          # SMEM scalar
        x_tile = x_ref[0, :, pl.ds(jstart, Tj)]                       # fp32 residual
        o_ref[0] = (gamma * attn + x_tile).astype(o_ref.dtype)

    return kernel


def self_attention_forward(x_nchw, params):
    """x_nchw: (B, C, H, W) like the PyTorch module; returns (B, C, H, W)."""
    B, C, H, W = x_nchw.shape
    HW = H * W
    C8 = C // 8
    Ctot = 2 * C8 + C

    # NCHW -> (B, C, HW): a pure reshape, no transpose (channels on sublanes,
    # positions on lanes); the kernel writes the same layout back.
    x = x_nchw.reshape(B, C, HW).astype(jnp.float32)

    # Conv1d(kernel=1) weights (Cout, Cin, 1) -> one fused (Ctot, Cin) operand.
    w_all = jnp.concatenate(
        [params['q']['w'][:, :, 0],
         params['k']['w'][:, :, 0],
         params['v']['w'][:, :, 0]], axis=0).astype(jnp.bfloat16)      # (Ctot, C)
    b_all = jnp.concatenate(
        [params['q']['b'], params['k']['b'], params['v']['b']],
        axis=0).reshape(Ctot, 1).astype(jnp.float32)                   # (Ctot, 1)
    gamma = jnp.reshape(params['gamma'], (1,)).astype(jnp.float32)     # SMEM scalar

    Tj = _pick_key_tile(HW)
    nj = HW // Tj

    out = pl.pallas_call(
        _build_kernel(C8, Tj),
        out_shape=jax.ShapeDtypeStruct((B, C, HW), jnp.float32),
        grid_spec=pltpu.PrefetchScalarGridSpec(
            num_scalar_prefetch=0,
            grid=(B, nj),
            in_specs=[
                pl.BlockSpec((1, C, HW), lambda b, j: (b, 0, 0)),   # x (resident per batch)
                pl.BlockSpec((Ctot, C), lambda b, j: (0, 0)),       # fused q/k/v weight
                pl.BlockSpec((Ctot, 1), lambda b, j: (0, 0)),       # fused bias
                pl.BlockSpec(memory_space=pltpu.MemorySpace.SMEM),  # gamma scalar
            ],
            out_specs=pl.BlockSpec((1, C, Tj), lambda b, j: (b, 0, j)),
            scratch_shapes=[
                pltpu.VMEM((C8, HW), jnp.bfloat16),                 # q cache
                pltpu.VMEM((C8, HW), jnp.bfloat16),                 # k cache
                pltpu.VMEM((C, HW), jnp.bfloat16),                  # v cache
            ],
        ),
        compiler_params=pltpu.CompilerParams(
            # Batch elements are independent (megacore-parallel); key tiles
            # consume the q/k/v cache written at j == 0, so the inner axis
            # must remain "arbitrary" (sequential per batch element).
            dimension_semantics=("parallel", "arbitrary"),
            vmem_limit_bytes=64 * 1024 * 1024,
        ),
    )(x, w_all, b_all, gamma)

    return out.reshape(B, C, H, W)   # pure reshape back to NCHW


# ----------------------------------------------------------------------------
# Parameter construction replicating spectral_init + SpectralNorm (plain JAX,
# runs once at init time -- not part of the hot forward path).
# ----------------------------------------------------------------------------
def xavier_uniform(key, shape, gain):
    if len(shape) == 3:      # Conv1d (Cout, Cin, 1)
        fan_in = shape[1] * shape[2]
        fan_out = shape[0] * shape[2]
    else:                    # Linear (out, in)
        fan_in = shape[1]
        fan_out = shape[0]
    bound = gain * (6.0 / (fan_in + fan_out)) ** 0.5
    return jax.random.uniform(key, shape, jnp.float32, -bound, bound)


def spectral_normalize(w, u):
    """One power iteration + sigma division (SpectralNorm.compute_weight)."""
    wm = w.reshape(w.shape[0], -1)
    v = wm.T @ u
    v = v / jnp.linalg.norm(v)
    u2 = wm @ v
    u2 = u2 / jnp.linalg.norm(u2)
    sigma = u2 @ wm @ v
    return w / sigma


def make_conv1d(key, cin, cout, gain):
    kw, ku = jax.random.split(key)
    w = xavier_uniform(kw, (cout, cin, 1), gain)
    u = jax.random.normal(ku, (cout,), jnp.float32)
    return {'w': spectral_normalize(w, u), 'b': jnp.zeros((cout,), jnp.float32)}


def make_params(key, in_channel, gain=2.0 ** 0.5):
    kq, kk, kv = jax.random.split(key, 3)
    return {
        'q': make_conv1d(kq, in_channel, in_channel // 8, gain),
        'k': make_conv1d(kk, in_channel, in_channel // 8, gain),
        'v': make_conv1d(kv, in_channel, in_channel, gain),
        'gamma': jnp.float32(0.0),   # nn.Parameter(torch.tensor(0.0))
    }


# ----------------------------------------------------------------------------
# Pure-JAX reference (mirrors the PyTorch forward exactly, fp32) for self-check.
# ----------------------------------------------------------------------------
def self_attention_ref(x_nchw, params):
    B, C, H, W = x_nchw.shape
    flat = x_nchw.reshape(B, C, H * W).astype(jnp.float32)            # (B, C, N)
    wq = params['q']['w'][:, :, 0]; bq = params['q']['b']
    wk = params['k']['w'][:, :, 0]; bk = params['k']['b']
    wv = params['v']['w'][:, :, 0]; bv = params['v']['b']
    query = jnp.einsum('oc,bcn->bno', wq, flat) + bq[None, None, :]   # (B, N, C/8)
    key = jnp.einsum('oc,bcn->bon', wk, flat) + bk[None, :, None]     # (B, C/8, N)
    value = jnp.einsum('oc,bcn->bon', wv, flat) + bv[None, :, None]   # (B, C, N)
    qk = jnp.einsum('bno,bom->bnm', query, key)                       # (B, Nq, Nk)
    attn = jax.nn.softmax(qk, axis=1)                                 # torch dim=1
    out = jnp.einsum('bcn,bnm->bcm', value, attn).reshape(B, C, H, W)
    return params['gamma'] * out + x_nchw


# ----------------------------------------------------------------------------
if __name__ == "__main__":
    key = jax.random.PRNGKey(0)
    kx, kp = jax.random.split(key)
    # HW = 512 -> two lane-dense key tiles of 256 (exercises the tiled path);
    # C = 64 -> C/8 = 8 (tile-aligned q/k/v slices).
    B, C, H, W = 2, 64, 16, 32
    x = jax.random.normal(kx, (B, C, H, W), jnp.float32)   # NCHW like PyTorch
    params = make_params(kp, C)

    fwd = jax.jit(self_attention_forward)
    out = fwd(x, params)
    jax.block_until_ready(out)
    assert out.shape == (B, C, H, W)
    # gamma is initialized to 0 (as in the PyTorch module) -> output == input.
    assert bool(jnp.allclose(out, x, rtol=0.0, atol=1e-6))

    # Exercise the attention path with a non-zero gamma and compare vs pure-JAX
    # fp32 reference (bf16 MXU feeds -> loose tolerance).
    params_g = dict(params, gamma=jnp.float32(0.5))
    out_g = fwd(x, params_g)
    ref_g = self_attention_ref(x, params_g)
    jax.block_until_ready(out_g)
    assert bool(jnp.allclose(out_g, ref_g, rtol=5e-2, atol=5e-2))

    print("KERNEL_OK")
</pallas_src>

<mosaic_0001>
module attributes {stable_mosaic.version = 11 : i64} {
  func.func @kernel(%arg0: i32, %arg1: i32, %arg2: memref<1x64x512xf32, #tpu.memory_space<vmem>>, %arg3: memref<80x64xbf16, #tpu.memory_space<vmem>>, %arg4: memref<80x1xf32, #tpu.memory_space<vmem>>, %arg5: memref<1xf32, #tpu.memory_space<smem>>, %arg6: memref<1x64x256xf32, #tpu.memory_space<vmem>>, %arg7: memref<8x512xbf16, #tpu.memory_space<vmem>>, %arg8: memref<8x512xbf16, #tpu.memory_space<vmem>>, %arg9: memref<64x512xbf16, #tpu.memory_space<vmem>>) attributes {dimension_semantics = [#tpu.dimension_semantics<parallel>, #tpu.dimension_semantics<arbitrary>], iteration_bounds = array<i64: 2, 2>, scalar_prefetch = 0 : i64, scratch_operands = 3 : i64, tpu.core_type = #tpu.core_type<tc>, window_params = [{transform_indices = @transform_0, window_bounds = array<i64: 1, 64, 512>}, {pipeline_mode = #tpu.pipeline_mode<synchronous>, transform_indices = @transform_1, window_bounds = array<i64: 80, 64>}, {pipeline_mode = #tpu.pipeline_mode<synchronous>, transform_indices = @transform_2, window_bounds = array<i64: 80, 1>}, {transform_indices = @transform_3, window_bounds = array<i64: 1>}, {transform_indices = @transform_4, window_bounds = array<i64: 1, 64, 256>}]} {
    %c0_i32 = arith.constant 0 : i32
    %0 = arith.cmpi eq, %arg1, %c0_i32 : i32
    %1 = arith.extui %0 : i1 to i32
    %c0_i32_0 = arith.constant 0 : i32
    %2 = arith.cmpi ne, %1, %c0_i32_0 : i32
    scf.if %2 {
      %c0_14 = arith.constant 0 : index
      %c0_15 = arith.constant 0 : index
      %c0_16 = arith.constant 0 : index
      %32 = vector.load %arg2[%c0_14, %c0_15, %c0_16] : memref<1x64x512xf32, #tpu.memory_space<vmem>>, vector<1x64x512xf32>
      %33 = vector.shape_cast %32 : vector<1x64x512xf32> to vector<64x512xf32>
      %34 = arith.truncf %33 : vector<64x512xf32> to vector<64x512xbf16>
      %c0_17 = arith.constant 0 : index
      %c0_18 = arith.constant 0 : index
      %35 = vector.load %arg3[%c0_17, %c0_18] : memref<80x64xbf16, #tpu.memory_space<vmem>>, vector<80x64xbf16>
      %cst_19 = arith.constant dense<0.000000e+00> : vector<80x512xf32>
      %36 = tpu.matmul %35, %34, %cst_19 {dimension_numbers = #tpu.dot_dimension_numbers<[1], [0], [0], [1], [0, 0, 1, 1], [], []>} : vector<80x64xbf16>, vector<64x512xbf16>, vector<80x512xf32> -> vector<80x512xf32>
      %c0_20 = arith.constant 0 : index
      %c0_21 = arith.constant 0 : index
      %37 = vector.load %arg4[%c0_20, %c0_21] : memref<80x1xf32, #tpu.memory_space<vmem>>, vector<80x1xf32>
      %38 = vector.broadcast %37 : vector<80x1xf32> to vector<80x512xf32>
      %39 = arith.addf %36, %38 : vector<80x512xf32>
      %40 = vector.extract_strided_slice %39 {offsets = [0, 0], sizes = [8, 512], strides = [1, 1]} : vector<80x512xf32> to vector<8x512xf32>
      %41 = arith.truncf %40 : vector<8x512xf32> to vector<8x512xbf16>
      %c0_22 = arith.constant 0 : index
      %c0_23 = arith.constant 0 : index
      %42 = vector.load %arg7[%c0_22, %c0_23] : memref<8x512xbf16, #tpu.memory_space<vmem>>, vector<8x512xbf16>
      tpu.vector_store %arg7[%c0_22, %c0_23], %41 {strides = array<i32>} : memref<8x512xbf16, #tpu.memory_space<vmem>>, vector<8x512xbf16>,
      %43 = vector.extract_strided_slice %39 {offsets = [8, 0], sizes = [8, 512], strides = [1, 1]} : vector<80x512xf32> to vector<8x512xf32>
      %44 = arith.truncf %43 : vector<8x512xf32> to vector<8x512xbf16>
      %c0_24 = arith.constant 0 : index
      %c0_25 = arith.constant 0 : index
      %45 = vector.load %arg8[%c0_24, %c0_25] : memref<8x512xbf16, #tpu.memory_space<vmem>>, vector<8x512xbf16>
      tpu.vector_store %arg8[%c0_24, %c0_25], %44 {strides = array<i32>} : memref<8x512xbf16, #tpu.memory_space<vmem>>, vector<8x512xbf16>,
      %46 = vector.extract_strided_slice %39 {offsets = [16, 0], sizes = [64, 512], strides = [1, 1]} : vector<80x512xf32> to vector<64x512xf32>
      %47 = arith.truncf %46 : vector<64x512xf32> to vector<64x512xbf16>
      %c0_26 = arith.constant 0 : index
      %c0_27 = arith.constant 0 : index
      %48 = vector.load %arg9[%c0_26, %c0_27] : memref<64x512xbf16, #tpu.memory_space<vmem>>, vector<64x512xbf16>
      tpu.vector_store %arg9[%c0_26, %c0_27], %47 {strides = array<i32>} : memref<64x512xbf16, #tpu.memory_space<vmem>>, vector<64x512xbf16>,
    } else {
    }
    %c256_i32 = arith.constant 256 : i32
    %3 = arith.muli %arg1, %c256_i32 : i32
    %4 = tpu.assume_multiple %3, 256 : i32
    %c0 = arith.constant 0 : index
    %5 = arith.index_cast %4 : i32 to index
    %6 = vector.load %arg8[%c0, %5] : memref<8x512xbf16, #tpu.memory_space<vmem>>, vector<8x256xbf16>
    %c0_1 = arith.constant 0 : index
    %c0_2 = arith.constant 0 : index
    %7 = vector.load %arg7[%c0_1, %c0_2] : memref<8x512xbf16, #tpu.memory_space<vmem>>, vector<8x512xbf16>
    %cst = arith.constant dense<0.000000e+00> : vector<512x256xf32>
    %8 = tpu.matmul %7, %6, %cst {dimension_numbers = #tpu.dot_dimension_numbers<[0], [0], [1], [1], [0, 1, 1, 1], [], []>} : vector<8x512xbf16>, vector<8x256xbf16>, vector<512x256xf32> -> vector<512x256xf32>
    %cst_3 = arith.constant dense<0xFF800000> : vector<256xf32>
    %9 = vector.multi_reduction <maximumf>, %8, %cst_3 [0] : vector<512x256xf32> to vector<256xf32>
    %10 = vector.shape_cast %9 : vector<256xf32> to vector<1x256xf32>
    %11 = vector.broadcast %10 : vector<1x256xf32> to vector<512x256xf32>
    %12 = arith.subf %8, %11 : vector<512x256xf32>
    %13 = math.exp %12 : vector<512x256xf32>
    %cst_4 = arith.constant dense<0.000000e+00> : vector<256xf32>
    %14 = vector.multi_reduction <add>, %13, %cst_4 [0] : vector<512x256xf32> to vector<256xf32>
    %15 = vector.shape_cast %14 : vector<256xf32> to vector<1x256xf32>
    %16 = tpu.reciprocal %15 : vector<1x256xf32> -> vector<1x256xf32>
    %17 = vector.broadcast %16 : vector<1x256xf32> to vector<512x256xf32>
    %18 = arith.mulf %13, %17 : vector<512x256xf32>
    %19 = arith.truncf %18 : vector<512x256xf32> to vector<512x256xbf16>
    %c0_5 = arith.constant 0 : index
    %c0_6 = arith.constant 0 : index
    %20 = vector.load %arg9[%c0_5, %c0_6] : memref<64x512xbf16, #tpu.memory_space<vmem>>, vector<64x512xbf16>
    %cst_7 = arith.constant dense<0.000000e+00> : vector<64x256xf32>
    %21 = tpu.matmul %20, %19, %cst_7 {dimension_numbers = #tpu.dot_dimension_numbers<[1], [0], [0], [1], [0, 0, 1, 1], [], []>} : vector<64x512xbf16>, vector<512x256xbf16>, vector<64x256xf32> -> vector<64x256xf32>
    %c0_8 = arith.constant 0 : index
    %22 = memref.load %arg5[%c0_8] : memref<1xf32, #tpu.memory_space<smem>>
    %c0_9 = arith.constant 0 : index
    %c0_10 = arith.constant 0 : index
    %23 = arith.index_cast %4 : i32 to index
    %24 = vector.load %arg2[%c0_9, %c0_10, %23] : memref<1x64x512xf32, #tpu.memory_space<vmem>>, vector<1x64x256xf32>
    %25 = vector.shape_cast %24 : vector<1x64x256xf32> to vector<64x256xf32>
    %26 = vector.broadcast %22 : f32 to vector<64x256xf32>
    %27 = arith.mulf %26, %21 : vector<64x256xf32>
    %28 = arith.addf %27, %25 : vector<64x256xf32>
    %c0_11 = arith.constant 0 : index
    %c0_12 = arith.constant 0 : index
    %c0_13 = arith.constant 0 : index
    %29 = vector.load %arg6[%c0_11, %c0_12, %c0_13] : memref<1x64x256xf32, #tpu.memory_space<vmem>>, vector<1x64x256xf32>
    %30 = vector.shape_cast %29 : vector<1x64x256xf32> to vector<64x256xf32>
    %31 = vector.shape_cast %28 : vector<64x256xf32> to vector<1x64x256xf32>
    tpu.vector_store %arg6[%c0_11, %c0_12, %c0_13], %31 {strides = array<i32>} : memref<1x64x256xf32, #tpu.memory_space<vmem>>, vector<1x64x256xf32>,
    return
  }
  func.func @transform_0(%arg0: i32, %arg1: i32) -> (i32, i32, i32) {
    %c0_i32 = arith.constant 0 : i32
    %c0_i32_0 = arith.constant 0 : i32
    %c0_i32_1 = arith.constant 0 : i32
    return %arg0, %c0_i32, %c0_i32_0 : i32, i32, i32
  }
  func.func @transform_1(%arg0: i32, %arg1: i32) -> (i32, i32) {
    %c0_i32 = arith.constant 0 : i32
    %c0_i32_0 = arith.constant 0 : i32
    %c0_i32_1 = arith.constant 0 : i32
    return %c0_i32, %c0_i32_0 : i32, i32
  }
  func.func @transform_2(%arg0: i32, %arg1: i32) -> (i32, i32) {
    %c0_i32 = arith.constant 0 : i32
    %c0_i32_0 = arith.constant 0 : i32
    %c0_i32_1 = arith.constant 0 : i32
    return %c0_i32, %c0_i32_0 : i32, i32
  }
  func.func @transform_3(%arg0: i32, %arg1: i32) -> i32 {
    %c0_i32 = arith.constant 0 : i32
    %c0_i32_0 = arith.constant 0 : i32
    return %c0_i32 : i32
  }
  func.func @transform_4(%arg0: i32, %arg1: i32) -> (i32, i32, i32) {
    %c0_i32 = arith.constant 0 : i32
    %c0_i32_0 = arith.constant 0 : i32
    return %arg0, %c0_i32, %arg1 : i32, i32, i32
  }
}

</mosaic_0001>

<llo_original>
// kernel: self_attention_forward.1
$region0: #{self_attention_forward.1}
  #allocation0 [shape = 'u32[]', space=smem, size = 0x4, offset = 0x4, fixed_abs, tag = 'smem constant byte address 0x4 - core index']
  #allocation1 [shape = 'u32[144,128]{1,0:T(1,128)}', space=vmem, size = 0x12000, scoped, tag = 'internal scratch']
  #allocation2 [shape = 'bf16[8,512]{1,0:T(8,128)(2,1)}', space=vmem, size = 0x2000, scoped, tag = 'scratch operand']
  #allocation3 [shape = 'bf16[8,512]{1,0:T(8,128)(2,1)}', space=vmem, size = 0x2000, scoped, tag = 'scratch operand']
  #allocation4 [shape = 'bf16[64,512]{1,0:T(16,128)(2,1)}', space=vmem, size = 0x10000, scoped, tag = 'scratch operand']
  #allocation5 [shape = 'f32[1]{0:T(128)S(6)}', space=smem, size = 0x200, scoped, tag = 'scoped memory for self_attention_forward.1']
  %s0 = inlined_call_operand.hbm [shape: f32[2,64,512], index: 0, kind: input, shape index: {}]
  %s1 = inlined_call_operand.hbm [shape: bf16[80,64], index: 1, kind: input, shape index: {}]
  %s2 = inlined_call_operand.hbm [shape: f32[80,1], index: 2, kind: input, shape index: {}]
  %s3 = inlined_call_operand.<no memory space> [shape: f32[1], index: 3, kind: input, shape index: {}]
  %s4 = inlined_call_operand.hbm [shape: f32[2,64,512], index: 4, kind: output, shape index: {}]
  %s5 = sld [smem:[#allocation0]]
  $region65: #{self_attention_forward.1} parent=0
    _
  %s7 = ssub.s32 1, %s5
  %s8 = scalar_select 0, %s7, %s5
  %9 = sst [smem:[#allocation5]] %s3
  $region1: #{self_attention_forward.1} parent=0
    #allocation6 [shape = 'u8[262144]{0}', space=vmem, size = 0x40000, scoped, tag = 'input window, operand 0']
    #allocation7 [shape = 's32[2]{0}', space=sflag, size = 0x8, scoped, tag = 'scoped memory for self_attention_forward.1']
    #allocation8 [shape = 's32[2]{0}', space=sflag, size = 0x8, scoped, tag = 'scoped memory for self_attention_forward.1']
    #allocation9 [shape = 'u8[20480]{0}', space=vmem, size = 0x5000, scoped, tag = 'input window, operand 1, single buffered']
    #allocation10 [shape = 's32[1]{0}', space=sflag, size = 0x4, scoped, tag = 'scoped memory for self_attention_forward.1']
    #allocation11 [shape = 'u8[40960]{0}', space=vmem, size = 0xa000, scoped, tag = 'input window, operand 2, single buffered']
    #allocation12 [shape = 'u8[131072]{0}', space=vmem, size = 0x20000, scoped, tag = 'output window, operand 0']
    %10 = vsyncpa [#allocation7], 0
    %s11 = scalar_lea.sflag [#allocation7], 1
    %12 = vsyncpa %s11, 0
    %13 = vsyncpa [#allocation10], 0
    %14 = vsyncpa [#allocation8], 0
    %s15 = scalar_lea.sflag [#allocation8], 1
    %16 = vsyncpa %s15, 0
    loop: start=0, step=1, limit=6
    $region2: #{self_attention_forward.1} parent=1 // loop_pre_header
      _
    $region3: #{self_attention_forward.1} parent=1 // loop_header
      %s18 = sphi 0, %s22
      %p19 = scmp.ge.s32.totalorder %s18, 6
      %s25 = sphi 0, %s37
      %s26 = sphi 0, %s33
      %s27 = sphi 0, %s25
      %s28 = sphi 0, %s26
      %s29 = sphi 0, %s27
      %s30 = sphi 0, %s28
      %s40 = sphi 0, %s42
      %s43 = sphi 0, %s40
      %s44 = sphi 0, %s43
      %s60 = sphi 0, %s44
      %s64 = sphi 0, %s64
      %s66 = sphi 0, %s64
      %s67 = sphi 0, %s66
      %s81 = sphi 0, %s67
      %s85 = sphi 0, %s85
      %s87 = sphi 0, %s85
      %s88 = sphi 0, %s87
      %s102 = sphi 0, %s88
      %s106 = sphi 0, %s106
      %s108 = sphi 0, %s106
      %s109 = sphi 0, %s108
      %s123 = sphi 0, %s109
      %s131 = sphi 0, %s133
      %s134 = sphi 0, %s131
      %s135 = sphi 0, %s134
      %s151 = sphi 0, %s135
    $region4: #{self_attention_forward.1} parent=1 // loop_header_branch
      %21 = sbr.rel (%p19) target = $region8
    $region5: #{self_attention_forward.1} parent=1 // loop_body
      %s23 = ssub.s32 %s18, 1
      %s24 = ssub.s32 %s18, 2
      %s31 = sadd.s32 1, %s26
      %p32 = scmp.ge.s32.totalorder %s31, 2
      %s33 = scalar_select %p32, 0, %s31
      %s34 = sadd.s32 1, %s25
      %s35 = scalar_select %p32, %s34, %s25
      %p36 = scmp.ge.s32.totalorder %s35, 2
      %s37 = scalar_select %p36, 0, %s35
      %s38 = ssub.s32 %s25, %s37
      %p39 = scmp.eq.s32.totalorder %s38, 0
      %s41 = sadd.s32 %s40, 1
      %s42 = scalar_select %p39, %s40, %s41
      %p45 = pneg %p39
      %p46 = scmp.eq.s32.totalorder %s18, 3
      %p47 = por %p45, %p46
      %p48 = scmp.ne.s32.totalorder %s40, %s43
      %p49 = scmp.eq.s32.totalorder %s18, 0
      %p50 = por %p48, %p49
      %p51 = scmp.ne.s32.totalorder %s40, %s43
      %p52 = scmp.eq.s32.totalorder %s23, 3
      %p53 = por %p51, %p52
      %p54 = scmp.ne.s32.totalorder %s43, %s44
      %p55 = scmp.eq.s32.totalorder %s23, 0
      %p56 = por %p54, %p55
      %p57 = scmp.ne.s32.totalorder %s43, %s44
      %p58 = scmp.eq.s32.totalorder %s24, 3
      %p59 = por %p57, %p58
      %p61 = scmp.ne.s32.totalorder %s44, %s60
      %p62 = scmp.eq.s32.totalorder %s24, 0
      %p63 = por %p61, %p62
      %s65 = sadd.s32 %s64, 1
      %p68 = scmp.eq.s32.totalorder %s18, 3
      %p69 = scmp.ne.s32.totalorder %s64, %s66
      %p70 = scmp.eq.s32.totalorder %s18, 0
      %p71 = por %p69, %p70
      %p72 = scmp.ne.s32.totalorder %s64, %s66
      %p73 = scmp.eq.s32.totalorder %s23, 3
      %p74 = por %p72, %p73
      %p75 = scmp.ne.s32.totalorder %s66, %s67
      %p76 = scmp.eq.s32.totalorder %s23, 0
      %p77 = por %p75, %p76
      %p78 = scmp.ne.s32.totalorder %s66, %s67
      %p79 = scmp.eq.s32.totalorder %s24, 3
      %p80 = por %p78, %p79
      %p82 = scmp.ne.s32.totalorder %s67, %s81
      %p83 = scmp.eq.s32.totalorder %s24, 0
      %p84 = por %p82, %p83
      %s86 = sadd.s32 %s85, 1
      %p89 = scmp.eq.s32.totalorder %s18, 3
      %p90 = scmp.ne.s32.totalorder %s85, %s87
      %p91 = scmp.eq.s32.totalorder %s18, 0
      %p92 = por %p90, %p91
      %p93 = scmp.ne.s32.totalorder %s85, %s87
      %p94 = scmp.eq.s32.totalorder %s23, 3
      %p95 = por %p93, %p94
      %p96 = scmp.ne.s32.totalorder %s87, %s88
      %p97 = scmp.eq.s32.totalorder %s23, 0
      %p98 = por %p96, %p97
      %p99 = scmp.ne.s32.totalorder %s87, %s88
      %p100 = scmp.eq.s32.totalorder %s24, 3
      %p101 = por %p99, %p100
      %p103 = scmp.ne.s32.totalorder %s88, %s102
      %p104 = scmp.eq.s32.totalorder %s24, 0
      %p105 = por %p103, %p104
      %s107 = sadd.s32 %s106, 1
      %p110 = scmp.eq.s32.totalorder %s18, 3
      %p111 = scmp.ne.s32.totalorder %s106, %s108
      %p112 = scmp.eq.s32.totalorder %s18, 0
      %p113 = por %p111, %p112
      %p114 = scmp.ne.s32.totalorder %s106, %s108
      %p115 = scmp.eq.s32.totalorder %s23, 3
      %p116 = por %p114, %p115
      %p117 = scmp.ne.s32.totalorder %s108, %s109
      %p118 = scmp.eq.s32.totalorder %s23, 0
      %p119 = por %p117, %p118
      %p120 = scmp.ne.s32.totalorder %s108, %s109
      %p121 = scmp.eq.s32.totalorder %s24, 3
      %p122 = por %p120, %p121
      %p124 = scmp.ne.s32.totalorder %s109, %s123
      %p125 = scmp.eq.s32.totalorder %s24, 0
      %p126 = por %p124, %p125
      %s127 = ssub.s32 %s25, %s37
      %s128 = ssub.s32 %s26, %s33
      %s129 = sor.u32 %s127, %s128
      %p130 = scmp.eq.s32.totalorder %s129, 0
      %s132 = sadd.s32 %s131, 1
      %s133 = scalar_select %p130, %s131, %s132
      %p136 = pneg %p130
      %p137 = scmp.eq.s32.totalorder %s18, 3
      %p138 = por %p136, %p137
      %p139 = scmp.ne.s32.totalorder %s131, %s134
      %p140 = scmp.eq.s32.totalorder %s18, 0
      %p141 = por %p139, %p140
      %p142 = scmp.ne.s32.totalorder %s131, %s134
      %p143 = scmp.eq.s32.totalorder %s23, 3
      %p144 = por %p142, %p143
      %p145 = scmp.ne.s32.totalorder %s134, %s135
      %p146 = scmp.eq.s32.totalorder %s23, 0
      %p147 = por %p145, %p146
      %p148 = scmp.ne.s32.totalorder %s134, %s135
      %p149 = scmp.eq.s32.totalorder %s24, 3
      %p150 = por %p148, %p149
      %p152 = scmp.ne.s32.totalorder %s135, %s151
      %p153 = scmp.eq.s32.totalorder %s24, 0
      %p154 = por %p152, %p153
      %p155 = scmp.le.s32.totalorder 1, %s18
      %p156 = scmp.lt.s32.totalorder %s18, 5
      %p157 = pnand %p155, %p156
      %p158 = pneg %p157
      // Predicated region
      $region9: #{self_attention_forward.1} parent=5 // pred_check
        _
      $region10: #{self_attention_forward.1} parent=5 // pred_check_branch
        %160 = sbr.rel (%p157) target = $region12
      $region11: #{self_attention_forward.1} parent=5 // pred_region
        %s161 = ssub.s32 %s18, 1
        // Predicated region
        $region13: #{self_attention_forward.1} parent=11 // pred_check
          %p162 = pneg %p77
        $region14: #{self_attention_forward.1} parent=11 // pred_check_branch
          %164 = sbr.rel (%p162) target = $region16
        $region15: #{self_attention_forward.1} parent=11 // pred_region
          %s166 = ssub.s32 640, 640
          %167 = vsyncadd [#allocation10], %s166
          %s168 = sshll.u32 [#allocation9], 4
          %s169 = int_to_ptr.vmem [resolvable:$true] %s168
          %174 = dma.hbm_to_vmem [thread:$0]  %s1, 640, %s169, [#allocation10], 64, 64, 4
        $region16: #{self_attention_forward.1} parent=11 // pred_fallthru
          _
        // Predicated region
        $region17: #{self_attention_forward.1} parent=11 // pred_check
          %p175 = pneg %p98
        $region18: #{self_attention_forward.1} parent=11 // pred_check_branch
          %177 = sbr.rel (%p175) target = $region20
        $region19: #{self_attention_forward.1} parent=11 // pred_region
          %s179 = ssub.s32 1280, 1280
          %180 = vsyncadd [#allocation10], %s179
          %s181 = sshll.u32 [#allocation11], 4
          %s182 = int_to_ptr.vmem [resolvable:$true] %s181
          %187 = dma.hbm_to_vmem [thread:$0]  %s2, 1280, %s182, [#allocation10], 128, 128, 8
        $region20: #{self_attention_forward.1} parent=11 // pred_fallthru
          _
        // Predicated region
        $region21: #{self_attention_forward.1} parent=11 // pred_check
          %p188 = pneg %p119
        $region22: #{self_attention_forward.1} parent=11 // pred_check_branch
          %190 = sbr.rel (%p188) target = $region24
        $region23: #{self_attention_forward.1} parent=11 // pred_region
          _
        $region24: #{self_attention_forward.1} parent=11 // pred_fallthru
          _
      $region12: #{self_attention_forward.1} parent=5 // pred_fallthru
        _
      %p191 = scmp.lt.s32.totalorder %s18, 4
      // Predicated region
      $region25: #{self_attention_forward.1} parent=5 // pred_check
        %p192 = pneg %p191
      $region26: #{self_attention_forward.1} parent=5 // pred_check_branch
        %194 = sbr.rel (%p192) target = $region28
      $region27: #{self_attention_forward.1} parent=5 // pred_region
        // Predicated region
        $region29: #{self_attention_forward.1} parent=27 // pred_check
          %p195 = pneg %p50
        $region30: #{self_attention_forward.1} parent=27 // pred_check_branch
          %197 = sbr.rel (%p195) target = $region32
        $region31: #{self_attention_forward.1} parent=27 // pred_region
          %s198 = sand.u32 %s40, 1
          %s199 = scalar_lea.sflag [#allocation7], %s198
          %s200 = sand.u32 %s40, 1
          %s201 = smul.addr %s200, 256
          %s202 = scalar_lea.vmem [#allocation6], %s201
          %s204 = ssub.s32 4096, 4096
          %205 = vsyncadd %s199, %s204
          %s206 = smul.addr %s25, 32
          %s207 = smul.addr %s206, 128
          %s208 = scalar_lea.hbm %s0, %s207
          %s209 = sshll.u32 %s202, 4
          %s210 = int_to_ptr.vmem [resolvable:$true] %s209
          %215 = dma.hbm_to_vmem [thread:$0]  %s208, 4096, %s210, %s199, 512, 512, 32
        $region32: #{self_attention_forward.1} parent=27 // pred_fallthru
          _
      $region28: #{self_attention_forward.1} parent=5 // pred_fallthru
        _
      %p216 = scmp.le.s32.totalorder 1, %s18
      %p217 = scmp.lt.s32.totalorder %s18, 5
      %p218 = pnand %p216, %p217
      %p219 = pneg %p218
      // Predicated region
      $region33: #{self_attention_forward.1} parent=5 // pred_check
        _
      $region34: #{self_attention_forward.1} parent=5 // pred_check_branch
        %221 = sbr.rel (%p218) target = $region36
      $region35: #{self_attention_forward.1} parent=5 // pred_region
        %s222 = ssub.s32 %s18, 1
        %s223 = sand.u32 %s43, 1
        %s224 = scalar_lea.sflag [#allocation7], %s223
        %s225 = sand.u32 %s43, 1
        %s226 = smul.addr %s225, 256
        %s227 = scalar_lea.vmem [#allocation6], %s226
        // Predicated region
        $region37: #{self_attention_forward.1} parent=35 // pred_check
          %p228 = pneg %p56
        $region38: #{self_attention_forward.1} parent=35 // pred_check_branch
          %230 = sbr.rel (%p228) target = $region40
        $region39: #{self_attention_forward.1} parent=35 // pred_region
          %231 = dma.done %s224, 4096
        $region40: #{self_attention_forward.1} parent=35 // pred_fallthru
          _
        // Predicated region
        $region41: #{self_attention_forward.1} parent=35 // pred_check
          %p232 = pneg %p77
        $region42: #{self_attention_forward.1} parent=35 // pred_check_branch
          %234 = sbr.rel (%p232) target = $region44
        $region43: #{self_attention_forward.1} parent=35 // pred_region
          %235 = dma.done [#allocation10], 640
        $region44: #{self_attention_forward.1} parent=35 // pred_fallthru
          _
        // Predicated region
        $region45: #{self_attention_forward.1} parent=35 // pred_check
          %p236 = pneg %p98
        $region46: #{self_attention_forward.1} parent=35 // pred_check_branch
          %238 = sbr.rel (%p236) target = $region48
        $region47: #{self_attention_forward.1} parent=35 // pred_region
          %239 = dma.done [#allocation10], 1280
        $region48: #{self_attention_forward.1} parent=35 // pred_fallthru
          _
        %s240 = sand.u32 %s43, 1
        %s241 = scalar_lea.sflag [#allocation7], %s240
        %s242 = sand.u32 %s43, 1
        %s243 = smul.addr %s242, 256
        %s244 = scalar_lea.vmem [#allocation6], %s243
        %p245 = pneg %p56
        %p246 = pneg %p53
        %p247 = pneg %p77
        %p248 = pneg %p74
        %p249 = pneg %p98
        %p250 = pneg %p95
        %p251 = pneg %p119
        %p252 = pneg %p116
        %p253 = pneg %p147
        %p254 = pneg %p144
        %s255 = sand.u32 %s134, 1
        %s256 = scalar_lea.sflag [#allocation8], %s255
        %s257 = sand.u32 %s134, 1
        %s258 = smul.addr %s257, 128
        %s259 = scalar_lea.vmem [#allocation12], %s258
        %s260 = smul.u32 2, %s28
        %p262 = scmp.eq.s32.totalorder %s28, 0
        // Predicated region
        $region49: #{self_attention_forward.1} parent=35 // pred_check
          %p263 = pneg %p262
        $region50: #{self_attention_forward.1} parent=35 // pred_check_branch
          %265 = sbr.rel (%p263) target = $region52
        $region51: #{self_attention_forward.1} parent=35 // pred_region
          %v266 = vld [vmem:[%s227] sm:$0xff]
          %v267 = vld [vmem:[%s227 + $0x8] sm:$0xff]
          %v268 = vld [vmem:[%s227 + $0x10] sm:$0xff]
          %v269 = vld [vmem:[%s227 + $0x18] sm:$0xff]
          %v270 = vld [vmem:[%s227 + $0x20] sm:$0xff]
          %v271 = vld [vmem:[%s227 + $0x28] sm:$0xff]
          %v272 = vld [vmem:[%s227 + $0x30] sm:$0xff]
          %v273 = vld [vmem:[%s227 + $0x38] sm:$0xff]
          %v274 = vld [vmem:[%s227 + $0x40] sm:$0xff]
          %v275 = vld [vmem:[%s227 + $0x48] sm:$0xff]
          %v276 = vld [vmem:[%s227 + $0x50] sm:$0xff]
          %v277 = vld [vmem:[%s227 + $0x58] sm:$0xff]
          %v278 = vld [vmem:[%s227 + $0x60] sm:$0xff]
          %v279 = vld [vmem:[%s227 + $0x68] sm:$0xff]
          %v280 = vld [vmem:[%s227 + $0x70] sm:$0xff]
          %v281 = vld [vmem:[%s227 + $0x78] sm:$0xff]
          %v282 = vld [vmem:[%s227 + $0x80] sm:$0xff]
          %v283 = vld [vmem:[%s227 + $0x88] sm:$0xff]
          %v284 = vld [vmem:[%s227 + $0x90] sm:$0xff]
          %v285 = vld [vmem:[%s227 + $0x98] sm:$0xff]
          %v286 = vld [vmem:[%s227 + $0xa0] sm:$0xff]
          %v287 = vld [vmem:[%s227 + $0xa8] sm:$0xff]
          %v288 = vld [vmem:[%s227 + $0xb0] sm:$0xff]
          %v289 = vld [vmem:[%s227 + $0xb8] sm:$0xff]
          %v290 = vld [vmem:[%s227 + $0xc0] sm:$0xff]
          %v291 = vld [vmem:[%s227 + $0xc8] sm:$0xff]
          %v292 = vld [vmem:[%s227 + $0xd0] sm:$0xff]
          %v293 = vld [vmem:[%s227 + $0xd8] sm:$0xff]
          %v294 = vld [vmem:[%s227 + $0xe0] sm:$0xff]
          %v295 = vld [vmem:[%s227 + $0xe8] sm:$0xff]
          %v296 = vld [vmem:[%s227 + $0xf0] sm:$0xff]
          %v297 = vld [vmem:[%s227 + $0xf8] sm:$0xff]
          %v298 = vpack.c.bf16 %v270, %v266
          %v299 = vpack.c.bf16 %v271, %v267
          %v300 = vpack.c.bf16 %v272, %v268
          %v301 = vpack.c.bf16 %v273, %v269
          %v302 = vpack.c.bf16 %v278, %v274
          %v303 = vpack.c.bf16 %v279, %v275
          %v304 = vpack.c.bf16 %v280, %v276
          %v305 = vpack.c.bf16 %v281, %v277
          %v306 = vpack.c.bf16 %v286, %v282
          %v307 = vpack.c.bf16 %v287, %v283
          %v308 = vpack.c.bf16 %v288, %v284
          %v309 = vpack.c.bf16 %v289, %v285
          %v310 = vpack.c.bf16 %v294, %v290
          %v311 = vpack.c.bf16 %v295, %v291
          %v312 = vpack.c.bf16 %v296, %v292
          %v313 = vpack.c.bf16 %v297, %v293
          %v314 = vld [vmem:[#allocation9] sm:$0xf]
          %v315 = vld [vmem:[#allocation9 + $0x4] sm:$0xf]
          %v316 = vld [vmem:[#allocation9 + $0x8] sm:$0xf]
          %v317 = vld [vmem:[#allocation9 + $0xc] sm:$0xf]
          %v318 = vld [vmem:[#allocation9 + $0x10] sm:$0xf]
          %v319 = vld [vmem:[#allocation9 + $0x14] sm:$0xf]
          %v320 = vld [vmem:[#allocation9 + $0x18] sm:$0xf]
          %v321 = vld [vmem:[#allocation9 + $0x1c] sm:$0xf]
          %v322 = vld [vmem:[#allocation9 + $0x20] sm:$0xf]
          %v323 = vld [vmem:[#allocation9 + $0x24] sm:$0xf]
          %v324 = vld [vmem:[#allocation11] sm:$0xff]
          %v325 = vld [vmem:[#allocation11 + $0x8] sm:$0xff]
          %v326 = vld [vmem:[#allocation11 + $0x10] sm:$0xff]
          %v327 = vld [vmem:[#allocation11 + $0x18] sm:$0xff]
          %v328 = vld [vmem:[#allocation11 + $0x20] sm:$0xff]
          %v329 = vld [vmem:[#allocation11 + $0x28] sm:$0xff]
          %v330 = vld [vmem:[#allocation11 + $0x30] sm:$0xff]
          %v331 = vld [vmem:[#allocation11 + $0x38] sm:$0xff]
          %v332 = vld [vmem:[#allocation11 + $0x40] sm:$0xff]
          %v333 = vld [vmem:[#allocation11 + $0x48] sm:$0xff]
          %335 = vset.pattern.permute.xlu0 0
          %336 = vperm.xlu0 %335, %v324
          %v337 = vpop.permute.xlu0 %336
          %340 = vset.pattern.permute.xlu0 0
          %341 = vperm.xlu0 %340, %v325
          %v342 = vpop.permute.xlu0 %341
          %345 = vset.pattern.permute.xlu0 0
          %346 = vperm.xlu0 %345, %v326
          %v347 = vpop.permute.xlu0 %346
          %350 = vset.pattern.permute.xlu0 0
          %351 = vperm.xlu0 %350, %v327
          %v352 = vpop.permute.xlu0 %351
          %355 = vset.pattern.permute.xlu0 0
          %356 = vperm.xlu0 %355, %v328
          %v357 = vpop.permute.xlu0 %356
          %360 = vset.pattern.permute.xlu0 0
          %361 = vperm.xlu0 %360, %v329
          %v362 = vpop.permute.xlu0 %361
          %365 = vset.pattern.permute.xlu0 0
          %366 = vperm.xlu0 %365, %v330
          %v367 = vpop.permute.xlu0 %366
          %370 = vset.pattern.permute.xlu0 0
          %371 = vperm.xlu0 %370, %v331
          %v372 = vpop.permute.xlu0 %371
          %375 = vset.pattern.permute.xlu0 0
          %376 = vperm.xlu0 %375, %v332
          %v377 = vpop.permute.xlu0 %376
          %380 = vset.pattern.permute.xlu0 0
          %381 = vperm.xlu0 %380, %v333
          %v382 = vpop.permute.xlu0 %381
          %v394 = vunpack.c.l.b16 %v314
          %v395 = vunpack.c.l.b16 %v315
          %v396 = vunpack.c.l.b16 %v316
          %v397 = vunpack.c.l.b16 %v317
          %v398 = vunpack.c.l.b16 %v318
          %v399 = vunpack.c.l.b16 %v319
          %v400 = vunpack.c.l.b16 %v320
          %v401 = vunpack.c.l.b16 %v321
          %v402 = vunpack.c.l.b16 %v322
          %v403 = vunpack.c.l.b16 %v323
          %v404 = vpack.c.b16 %v395, %v394
          %v405 = vpack.c.b16 %v397, %v396
          %v406 = vpack.c.b16 %v399, %v398
          %v407 = vpack.c.b16 %v401, %v400
          %v408 = vpack.c.b16 %v403, %v402
          %vm409 = vcmask 523264
          %v411 = vsel %vm409, %v404, 0
          %v414 = vsel %vm409, %v405, 0
          %v417 = vsel %vm409, %v406, 0
          %v420 = vsel %vm409, %v407, 0
          %v423 = vsel %vm409, %v408, 0
          %425 = vmatprep.subr.bf16.mxu0 %v299
          %426 = vmatpush1.bf16.msra.mxu0 %v298
          %427 = vmatprep.subr.bf16.mxu0 %v303
          %428 = vmatpush1.bf16.msra.mxu0 %v302
          %429 = vmatprep.subr.bf16.mxu0 %v307
          %430 = vmatpush1.bf16.msra.mxu0 %v306
          %431 = vmatprep.subr.bf16.mxu0 %v311
          %432 = vmatpush1.bf16.msra.mxu0 %v310
          %433 = vmatprep.subr.bf16.mxu0 0
          %434 = vmatpush1.bf16.msra.mxu0 0
          %435 = vmatprep.subr.bf16.mxu0 0
          %436 = vmatpush1.bf16.msra.mxu0 0
          %437 = vmatprep.subr.bf16.mxu0 0
          %438 = vmatpush1.bf16.msra.mxu0 0
          %439 = vmatprep.subr.bf16.mxu0 0
          %440 = vmatpush1.bf16.msra.mxu0 0
          %441 = vmatprep.subr.bf16.mxu0 0
          %442 = vmatpush1.bf16.msra.mxu0 0
          %443 = vmatprep.subr.bf16.mxu0 0
          %444 = vmatpush1.bf16.msra.mxu0 0
          %445 = vmatprep.subr.bf16.mxu0 0
          %446 = vmatpush1.bf16.msra.mxu0 0
          %447 = vmatprep.subr.bf16.mxu0 0
          %448 = vmatpush1.bf16.msra.mxu0 0
          %449 = vmatprep.subr.bf16.mxu0 0
          %450 = vmatpush1.bf16.msra.mxu0 0
          %451 = vmatprep.subr.bf16.mxu0 0
          %452 = vmatpush1.bf16.msra.mxu0 0
          %453 = vmatprep.subr.bf16.mxu0 0
          %454 = vmatpush1.bf16.msra.mxu0 0
          %455 = vmatprep.subr.bf16.mxu0 0
          %456 = vmatpush1.bf16.msra.mxu0 0
          %457 = vmatprep.mubr.bf16.mxu0 0
          %458 = vmatmul.mubr.bf16.gmra.mrb[0].mxu0 %v411
          %v459 = vpop.f32.mrb[0].mxu0
          %v460 = vadd.f32 %v337, %v459
          %v461 = vpop.f32.mrb[0].mxu0
          %v462 = vadd.f32 %v337, %v461
          %v463 = vpop.f32.mrb[0].mxu0
          %v464 = vadd.f32 %v342, %v463
          %v465 = vpop.f32.mrb[0].mxu0
          %v466 = vadd.f32 %v342, %v465
          %467 = vmatprep.mubr.bf16.mxu0 0
          %468 = vmatmul.mubr.bf16.gmra.mrb[0].mxu0 %v414
          %v469 = vpop.f32.mrb[0].mxu0
          %v470 = vadd.f32 %v347, %v469
          %v471 = vpop.f32.mrb[0].mxu0
          %v472 = vadd.f32 %v347, %v471
          %v473 = vpop.f32.mrb[0].mxu0
          %v474 = vadd.f32 %v352, %v473
          %v475 = vpop.f32.mrb[0].mxu0
          %v476 = vadd.f32 %v352, %v475
          %477 = vmatprep.mubr.bf16.mxu0 0
          %478 = vmatmul.mubr.bf16.gmra.mrb[0].mxu0 %v417
          %v479 = vpop.f32.mrb[0].mxu0
          %v480 = vadd.f32 %v357, %v479
          %v481 = vpop.f32.mrb[0].mxu0
          %v482 = vadd.f32 %v357, %v481
          %v483 = vpop.f32.mrb[0].mxu0
          %v484 = vadd.f32 %v362, %v483
          %v485 = vpop.f32.mrb[0].mxu0
          %v486 = vadd.f32 %v362, %v485
          %487 = vmatprep.mubr.bf16.mxu0 0
          %488 = vmatmul.mubr.bf16.gmra.mrb[0].mxu0 %v420
          %v489 = vpop.f32.mrb[0].mxu0
          %v490 = vadd.f32 %v367, %v489
          %v491 = vpop.f32.mrb[0].mxu0
          %v492 = vadd.f32 %v367, %v491
          %v493 = vpop.f32.mrb[0].mxu0
          %v494 = vadd.f32 %v372, %v493
          %v495 = vpop.f32.mrb[0].mxu0
          %v496 = vadd.f32 %v372, %v495
          %497 = vmatprep.mubr.bf16.mxu0 0
          %498 = vmatmul.mubr.bf16.gmra.mrb[0].mxu0 %v423
          %v499 = vpop.f32.mrb[0].mxu0
          %v500 = vadd.f32 %v377, %v499
          %v501 = vpop.f32.mrb[0].mxu0
          %v502 = vadd.f32 %v377, %v501
          %v503 = vpop.f32.mrb[0].mxu0
          %v504 = vadd.f32 %v382, %v503
          %v505 = vpop.f32.mrb[0].mxu0
          %v506 = vadd.f32 %v382, %v505
          %507 = vdwg.mxu0
          %508 = vmatprep.subr.bf16.mxu0 %v301
          %509 = vmatpush1.bf16.msra.mxu0 %v300
          %510 = vmatprep.subr.bf16.mxu0 %v305
          %511 = vmatpush1.bf16.msra.mxu0 %v304
          %512 = vmatprep.subr.bf16.mxu0 %v309
          %513 = vmatpush1.bf16.msra.mxu0 %v308
          %514 = vmatprep.subr.bf16.mxu0 %v313
          %515 = vmatpush1.bf16.msra.mxu0 %v312
          %516 = vmatprep.subr.bf16.mxu0 0
          %517 = vmatpush1.bf16.msra.mxu0 0
          %518 = vmatprep.subr.bf16.mxu0 0
          %519 = vmatpush1.bf16.msra.mxu0 0
          %520 = vmatprep.subr.bf16.mxu0 0
          %521 = vmatpush1.bf16.msra.mxu0 0
          %522 = vmatprep.subr.bf16.mxu0 0
          %523 = vmatpush1.bf16.msra.mxu0 0
          %524 = vmatprep.subr.bf16.mxu0 0
          %525 = vmatpush1.bf16.msra.mxu0 0
          %526 = vmatprep.subr.bf16.mxu0 0
          %527 = vmatpush1.bf16.msra.mxu0 0
          %528 = vmatprep.subr.bf16.mxu0 0
          %529 = vmatpush1.bf16.msra.mxu0 0
          %530 = vmatprep.subr.bf16.mxu0 0
          %531 = vmatpush1.bf16.msra.mxu0 0
          %532 = vmatprep.subr.bf16.mxu0 0
          %533 = vmatpush1.bf16.msra.mxu0 0
          %534 = vmatprep.subr.bf16.mxu0 0
          %535 = vmatpush1.bf16.msra.mxu0 0
          %536 = vmatprep.subr.bf16.mxu0 0
          %537 = vmatpush1.bf16.msra.mxu0 0
          %538 = vmatprep.subr.bf16.mxu0 0
          %539 = vmatpush1.bf16.msra.mxu0 0
          %540 = vmatprep.mubr.bf16.mxu0 0
          %541 = vmatmul.mubr.bf16.gmra.mrb[0].mxu0 %v411
          %v542 = vpop.f32.mrb[0].mxu0
          %v543 = vadd.f32 %v337, %v542
          %v544 = vpop.f32.mrb[0].mxu0
          %v545 = vadd.f32 %v337, %v544
          %v546 = vpop.f32.mrb[0].mxu0
          %v547 = vadd.f32 %v342, %v546
          %v548 = vpop.f32.mrb[0].mxu0
          %v549 = vadd.f32 %v342, %v548
          %550 = vmatprep.mubr.bf16.mxu0 0
          %551 = vmatmul.mubr.bf16.gmra.mrb[0].mxu0 %v414
          %v552 = vpop.f32.mrb[0].mxu0
          %v553 = vadd.f32 %v347, %v552
          %v554 = vpop.f32.mrb[0].mxu0
          %v555 = vadd.f32 %v347, %v554
          %v556 = vpop.f32.mrb[0].mxu0
          %v557 = vadd.f32 %v352, %v556
          %v558 = vpop.f32.mrb[0].mxu0
          %v559 = vadd.f32 %v352, %v558
          %560 = vmatprep.mubr.bf16.mxu0 0
          %561 = vmatmul.mubr.bf16.gmra.mrb[0].mxu0 %v417
          %v562 = vpop.f32.mrb[0].mxu0
          %v563 = vadd.f32 %v357, %v562
          %v564 = vpop.f32.mrb[0].mxu0
          %v565 = vadd.f32 %v357, %v564
          %v566 = vpop.f32.mrb[0].mxu0
          %v567 = vadd.f32 %v362, %v566
          %v568 = vpop.f32.mrb[0].mxu0
          %v569 = vadd.f32 %v362, %v568
          %570 = vmatprep.mubr.bf16.mxu0 0
          %571 = vmatmul.mubr.bf16.gmra.mrb[0].mxu0 %v420
          %v572 = vpop.f32.mrb[0].mxu0
          %v573 = vadd.f32 %v367, %v572
          %v574 = vpop.f32.mrb[0].mxu0
          %v575 = vadd.f32 %v367, %v574
          %v576 = vpop.f32.mrb[0].mxu0
          %v577 = vadd.f32 %v372, %v576
          %v578 = vpop.f32.mrb[0].mxu0
          %v579 = vadd.f32 %v372, %v578
          %580 = vmatprep.mubr.bf16.mxu0 0
          %581 = vmatmul.mubr.bf16.gmra.mrb[0].mxu0 %v423
          %v582 = vpop.f32.mrb[0].mxu0
          %v583 = vadd.f32 %v377, %v582
          %v584 = vpop.f32.mrb[0].mxu0
          %v585 = vadd.f32 %v377, %v584
          %v586 = vpop.f32.mrb[0].mxu0
          %v587 = vadd.f32 %v382, %v586
          %v588 = vpop.f32.mrb[0].mxu0
          %v589 = vadd.f32 %v382, %v588
          %590 = vdwg.mxu0
          %v591 = vpack.c.bf16 %v460, %v460
          %v592 = vpack.c.bf16 %v462, %v462
          %v593 = vpack.c.bf16 %v543, %v543
          %v594 = vpack.c.bf16 %v545, %v545
          %v599 = vunpack.c.l.b16 %v591
          %v600 = vunpack.c.l.b16 %v592
          %v601 = vunpack.c.l.b16 %v593
          %v602 = vunpack.c.l.b16 %v594
          %v603 = vpack.c.b16 %v600, %v599
          %v604 = vpack.c.b16 %v602, %v601
          %607 = vst [vmem:[#allocation2] sm:$0xff] %v603
          %608 = vst [vmem:[#allocation2 + $0x8] sm:$0xff] %v604
          %v609 = vpack.c.bf16 %v464, %v464
          %v610 = vpack.c.bf16 %v466, %v466
          %v611 = vpack.c.bf16 %v547, %v547
          %v612 = vpack.c.bf16 %v549, %v549
          %v617 = vunpack.c.l.b16 %v609
          %v618 = vunpack.c.l.b16 %v610
          %v619 = vunpack.c.l.b16 %v611
          %v620 = vunpack.c.l.b16 %v612
          %v621 = vpack.c.b16 %v618, %v617
          %v622 = vpack.c.b16 %v620, %v619
          %625 = vst [vmem:[#allocation3] sm:$0xff] %v621
          %626 = vst [vmem:[#allocation3 + $0x8] sm:$0xff] %v622
          %v627 = vpack.c.bf16 %v474, %v470
          %v628 = vpack.c.bf16 %v476, %v472
          %v629 = vpack.c.bf16 %v557, %v553
          %v630 = vpack.c.bf16 %v559, %v555
          %v631 = vpack.c.bf16 %v484, %v480
          %v632 = vpack.c.bf16 %v486, %v482
          %v633 = vpack.c.bf16 %v567, %v563
          %v634 = vpack.c.bf16 %v569, %v565
          %v635 = vpack.c.bf16 %v494, %v490
          %v636 = vpack.c.bf16 %v496, %v492
          %v637 = vpack.c.bf16 %v577, %v573
          %v638 = vpack.c.bf16 %v579, %v575
          %v639 = vpack.c.bf16 %v504, %v500
          %v640 = vpack.c.bf16 %v506, %v502
          %v641 = vpack.c.bf16 %v587, %v583
          %v642 = vpack.c.bf16 %v589, %v585
          %643 = vst [vmem:[#allocation4] sm:$0xff] %v627
          %644 = vst [vmem:[#allocation4 + $0x8] sm:$0xff] %v628
          %645 = vst [vmem:[#allocation4 + $0x10] sm:$0xff] %v629
          %646 = vst [vmem:[#allocation4 + $0x18] sm:$0xff] %v630
          %647 = vst [vmem:[#allocation4 + $0x20] sm:$0xff] %v631
          %648 = vst [vmem:[#allocation4 + $0x28] sm:$0xff] %v632
          %649 = vst [vmem:[#allocation4 + $0x30] sm:$0xff] %v633
          %650 = vst [vmem:[#allocation4 + $0x38] sm:$0xff] %v634
          %651 = vst [vmem:[#allocation4 + $0x40] sm:$0xff] %v635
          %652 = vst [vmem:[#allocation4 + $0x48] sm:$0xff] %v636
          %653 = vst [vmem:[#allocation4 + $0x50] sm:$0xff] %v637
          %654 = vst [vmem:[#allocation4 + $0x58] sm:$0xff] %v638
          %655 = vst [vmem:[#allocation4 + $0x60] sm:$0xff] %v639
          %656 = vst [vmem:[#allocation4 + $0x68] sm:$0xff] %v640
          %657 = vst [vmem:[#allocation4 + $0x70] sm:$0xff] %v641
          %658 = vst [vmem:[#allocation4 + $0x78] sm:$0xff] %v642
        $region52: #{self_attention_forward.1} parent=35 // pred_fallthru
          _
        %s659 = smul.u32 %s28, 256
        %s660 = sshra.s32 %s659, 7
        %s661 = sand.u32 %s659, 127
        %s662 = smul.addr %s660, 4
        %s663 = scalar_lea.vmem [#allocation3], %s662
        %v664 = vld [vmem:[%s663] sm:$0xff]
        %v665 = vld [vmem:[#allocation2] sm:$0xff]
        %v666 = vld [vmem:[#allocation2 + $0x8] sm:$0xff]
        %v669 = vunpack.c.l.b16 %v665
        %v670 = vunpack.c.h.b16 %v665
        %v671 = vunpack.c.l.b16 %v666
        %v672 = vunpack.c.h.b16 %v666
        %v673 = vpack.c.b16 %v669, %v669
        %v674 = vpack.c.b16 %v670, %v670
        %v675 = vpack.c.b16 %v671, %v671
        %v676 = vpack.c.b16 %v672, %v672
        %681 = vxpose.xlu0.c.b16.start [1/8] %v673, 128
        %682 = vxpose.xlu0.c.b16.cont [2/8] 0, 128
        %683 = vxpose.xlu0.c.b16.cont [3/8] 0, 128
        %684 = vxpose.xlu0.c.b16.cont [4/8] 0, 128
        %685 = vxpose.xlu0.c.b16.cont [5/8] 0, 128
        %686 = vxpose.xlu0.c.b16.cont [6/8] 0, 128
        %687 = vxpose.xlu0.c.b16.cont [7/8] 0, 128
        %688 = vxpose.xlu0.c.b16.end [8/8] 0, 128
        %v689 = vpop.trf.xlu0
        %v690 = vpop.trf.xlu0
        %v691 = vpop.trf.xlu0
        %v692 = vpop.trf.xlu0
        %v693 = vpop.trf.xlu0
        %v694 = vpop.trf.xlu0
        %v695 = vpop.trf.xlu0
        %v696 = vpop.trf.xlu0
        %697 = vxpose.xlu0.c.b16.start [1/8] %v674, 128
        %698 = vxpose.xlu0.c.b16.cont [2/8] 0, 128
        %699 = vxpose.xlu0.c.b16.cont [3/8] 0, 128
        %700 = vxpose.xlu0.c.b16.cont [4/8] 0, 128
        %701 = vxpose.xlu0.c.b16.cont [5/8] 0, 128
        %702 = vxpose.xlu0.c.b16.cont [6/8] 0, 128
        %703 = vxpose.xlu0.c.b16.cont [7/8] 0, 128
        %704 = vxpose.xlu0.c.b16.end [8/8] 0, 128
        %v705 = vpop.trf.xlu0
        %v706 = vpop.trf.xlu0
        %v707 = vpop.trf.xlu0
        %v708 = vpop.trf.xlu0
        %v709 = vpop.trf.xlu0
        %v710 = vpop.trf.xlu0
        %v711 = vpop.trf.xlu0
        %v712 = vpop.trf.xlu0
        %713 = vxpose.xlu0.c.b16.start [1/8] %v675, 128
        %714 = vxpose.xlu0.c.b16.cont [2/8] 0, 128
        %715 = vxpose.xlu0.c.b16.cont [3/8] 0, 128
        %716 = vxpose.xlu0.c.b16.cont [4/8] 0, 128
        %717 = vxpose.xlu0.c.b16.cont [5/8] 0, 128
        %718 = vxpose.xlu0.c.b16.cont [6/8] 0, 128
        %719 = vxpose.xlu0.c.b16.cont [7/8] 0, 128
        %720 = vxpose.xlu0.c.b16.end [8/8] 0, 128
        %v721 = vpop.trf.xlu0
        %v722 = vpop.trf.xlu0
        %v723 = vpop.trf.xlu0
        %v724 = vpop.trf.xlu0
        %v725 = vpop.trf.xlu0
        %v726 = vpop.trf.xlu0
        %v727 = vpop.trf.xlu0
        %v728 = vpop.trf.xlu0
        %729 = vxpose.xlu0.c.b16.start [1/8] %v676, 128
        %730 = vxpose.xlu0.c.b16.cont [2/8] 0, 128
        %731 = vxpose.xlu0.c.b16.cont [3/8] 0, 128
        %732 = vxpose.xlu0.c.b16.cont [4/8] 0, 128
        %733 = vxpose.xlu0.c.b16.cont [5/8] 0, 128
        %734 = vxpose.xlu0.c.b16.cont [6/8] 0, 128
        %735 = vxpose.xlu0.c.b16.cont [7/8] 0, 128
        %736 = vxpose.xlu0.c.b16.end [8/8] 0, 128
        %v737 = vpop.trf.xlu0
        %v738 = vpop.trf.xlu0
        %v739 = vpop.trf.xlu0
        %v740 = vpop.trf.xlu0
        %v741 = vpop.trf.xlu0
        %v742 = vpop.trf.xlu0
        %v743 = vpop.trf.xlu0
        %v744 = vpop.trf.xlu0
        %v746 = vunpack.c.l.b16 %v664
        %v747 = vunpack.c.h.b16 %v664
        %v748 = vpack.c.b16 %v746, %v746
        %v749 = vpack.c.b16 %v747, %v747
        %vm750 = vcmask 64512
        %v752 = vsel %vm750, %v689, 0
        %v755 = vsel %vm750, %v690, 0
        %v758 = vsel %vm750, %v691, 0
        %v761 = vsel %vm750, %v692, 0
        %v764 = vsel %vm750, %v693, 0
        %v767 = vsel %vm750, %v694, 0
        %v770 = vsel %vm750, %v695, 0
        %v773 = vsel %vm750, %v696, 0
        %v776 = vsel %vm750, %v705, 0
        %v779 = vsel %vm750, %v706, 0
        %v782 = vsel %vm750, %v707, 0
        %v785 = vsel %vm750, %v708, 0
        %v788 = vsel %vm750, %v709, 0
        %v791 = vsel %vm750, %v710, 0
        %v794 = vsel %vm750, %v711, 0
        %v797 = vsel %vm750, %v712, 0
        %v800 = vsel %vm750, %v721, 0
        %v803 = vsel %vm750, %v722, 0
        %v806 = vsel %vm750, %v723, 0
        %v809 = vsel %vm750, %v724, 0
        %v812 = vsel %vm750, %v725, 0
        %v815 = vsel %vm750, %v726, 0
        %v818 = vsel %vm750, %v727, 0
        %v821 = vsel %vm750, %v728, 0
        %v824 = vsel %vm750, %v737, 0
        %v827 = vsel %vm750, %v738, 0
        %v830 = vsel %vm750, %v739, 0
        %v833 = vsel %vm750, %v740, 0
        %v836 = vsel %vm750, %v741, 0
        %v839 = vsel %vm750, %v742, 0
        %v842 = vsel %vm750, %v743, 0
        %v845 = vsel %vm750, %v744, 0
        %vm847 = vcmask 1043456
        %v849 = vsel %vm847, %v748, 0
        %v852 = vsel %vm847, %v749, 0
        %854 = vmatprep.subr.bf16.mxu0 %v852
        %855 = vmatpush1.bf16.msra.mxu0 %v849
        %856 = vmatprep.subr.bf16.mxu0 0
        %857 = vmatpush1.bf16.msra.mxu0 0
        %858 = vmatprep.subr.bf16.mxu0 0
        %859 = vmatpush1.bf16.msra.mxu0 0
        %860 = vmatprep.subr.bf16.mxu0 0
        %861 = vmatpush1.bf16.msra.mxu0 0
        %862 = vmatprep.subr.bf16.mxu0 0
        %863 = vmatpush1.bf16.msra.mxu0 0
        %864 = vmatprep.subr.bf16.mxu0 0
        %865 = vmatpush1.bf16.msra.mxu0 0
        %866 = vmatprep.subr.bf16.mxu0 0
        %867 = vmatpush1.bf16.msra.mxu0 0
        %868 = vmatprep.subr.bf16.mxu0 0
        %869 = vmatpush1.bf16.msra.mxu0 0
        %870 = vmatprep.subr.bf16.mxu0 0
        %871 = vmatpush1.bf16.msra.mxu0 0
        %872 = vmatprep.subr.bf16.mxu0 0
        %873 = vmatpush1.bf16.msra.mxu0 0
        %874 = vmatprep.subr.bf16.mxu0 0
        %875 = vmatpush1.bf16.msra.mxu0 0
        %876 = vmatprep.subr.bf16.mxu0 0
        %877 = vmatpush1.bf16.msra.mxu0 0
        %878 = vmatprep.subr.bf16.mxu0 0
        %879 = vmatpush1.bf16.msra.mxu0 0
        %880 = vmatprep.subr.bf16.mxu0 0
        %881 = vmatpush1.bf16.msra.mxu0 0
        %882 = vmatprep.subr.bf16.mxu0 0
        %883 = vmatpush1.bf16.msra.mxu0 0
        %884 = vmatprep.subr.bf16.mxu0 0
        %885 = vmatpush1.bf16.msra.mxu0 0
        %886 = vmatprep.mubr.bf16.mxu0 0
        %887 = vmatmul.mubr.bf16.gmra.mrb[0].mxu0 %v752
        %v888 = vpop.f32.mrb[0].mxu0
        %v889 = vadd.f32 0.0, %v888
        %v890 = vpop.f32.mrb[0].mxu0
        %v891 = vadd.f32 0.0, %v890
        %v892 = vpop.f32.mrb[0].mxu0
        %v893 = vadd.f32 0.0, %v892
        %v894 = vpop.f32.mrb[0].mxu0
        %v895 = vadd.f32 0.0, %v894
        %896 = vmatprep.mubr.bf16.mxu0 0
        %897 = vmatmul.mubr.bf16.gmra.mrb[0].mxu0 %v755
        %v898 = vpop.f32.mrb[0].mxu0
        %v899 = vadd.f32 0.0, %v898
        %v900 = vpop.f32.mrb[0].mxu0
        %v901 = vadd.f32 0.0, %v900
        %v902 = vpop.f32.mrb[0].mxu0
        %v903 = vadd.f32 0.0, %v902
        %v904 = vpop.f32.mrb[0].mxu0
        %v905 = vadd.f32 0.0, %v904
        %906 = vmatprep.mubr.bf16.mxu0 0
        %907 = vmatmul.mubr.bf16.gmra.mrb[0].mxu0 %v758
        %v908 = vpop.f32.mrb[0].mxu0
        %v909 = vadd.f32 0.0, %v908
        %v910 = vpop.f32.mrb[0].mxu0
        %v911 = vadd.f32 0.0, %v910
        %v912 = vpop.f32.mrb[0].mxu0
        %v913 = vadd.f32 0.0, %v912
        %v914 = vpop.f32.mrb[0].mxu0
        %v915 = vadd.f32 0.0, %v914
        %916 = vmatprep.mubr.bf16.mxu0 0
        %917 = vmatmul.mubr.bf16.gmra.mrb[0].mxu0 %v761
        %v918 = vpop.f32.mrb[0].mxu0
        %v919 = vadd.f32 0.0, %v918
        %v920 = vpop.f32.mrb[0].mxu0
        %v921 = vadd.f32 0.0, %v920
        %v922 = vpop.f32.mrb[0].mxu0
        %v923 = vadd.f32 0.0, %v922
        %v924 = vpop.f32.mrb[0].mxu0
        %v925 = vadd.f32 0.0, %v924
        %926 = vmatprep.mubr.bf16.mxu0 0
        %927 = vmatmul.mubr.bf16.gmra.mrb[0].mxu0 %v764
        %v928 = vpop.f32.mrb[0].mxu0
        %v929 = vadd.f32 0.0, %v928
        %v930 = vpop.f32.mrb[0].mxu0
        %v931 = vadd.f32 0.0, %v930
        %v932 = vpop.f32.mrb[0].mxu0
        %v933 = vadd.f32 0.0, %v932
        %v934 = vpop.f32.mrb[0].mxu0
        %v935 = vadd.f32 0.0, %v934
        %936 = vmatprep.mubr.bf16.mxu0 0
        %937 = vmatmul.mubr.bf16.gmra.mrb[0].mxu0 %v767
        %v938 = vpop.f32.mrb[0].mxu0
        %v939 = vadd.f32 0.0, %v938
        %v940 = vpop.f32.mrb[0].mxu0
        %v941 = vadd.f32 0.0, %v940
        %v942 = vpop.f32.mrb[0].mxu0
        %v943 = vadd.f32 0.0, %v942
        %v944 = vpop.f32.mrb[0].mxu0
        %v945 = vadd.f32 0.0, %v944
        %946 = vmatprep.mubr.bf16.mxu0 0
        %947 = vmatmul.mubr.bf16.gmra.mrb[0].mxu0 %v770
        %v948 = vpop.f32.mrb[0].mxu0
        %v949 = vadd.f32 0.0, %v948
        %v950 = vpop.f32.mrb[0].mxu0
        %v951 = vadd.f32 0.0, %v950
        %v952 = vpop.f32.mrb[0].mxu0
        %v953 = vadd.f32 0.0, %v952
        %v954 = vpop.f32.mrb[0].mxu0
        %v955 = vadd.f32 0.0, %v954
        %956 = vmatprep.mubr.bf16.mxu0 0
        %957 = vmatmul.mubr.bf16.gmra.mrb[0].mxu0 %v773
        %v958 = vpop.f32.mrb[0].mxu0
        %v959 = vadd.f32 0.0, %v958
        %v960 = vpop.f32.mrb[0].mxu0
        %v961 = vadd.f32 0.0, %v960
        %v962 = vpop.f32.mrb[0].mxu0
        %v963 = vadd.f32 0.0, %v962
        %v964 = vpop.f32.mrb[0].mxu0
        %v965 = vadd.f32 0.0, %v964
        %966 = vmatprep.mubr.bf16.mxu0 0
        %967 = vmatmul.mubr.bf16.gmra.mrb[0].mxu0 %v776
        %v968 = vpop.f32.mrb[0].mxu0
        %v969 = vadd.f32 0.0, %v968
        %v970 = vpop.f32.mrb[0].mxu0
        %v971 = vadd.f32 0.0, %v970
        %v972 = vpop.f32.mrb[0].mxu0
        %v973 = vadd.f32 0.0, %v972
        %v974 = vpop.f32.mrb[0].mxu0
        %v975 = vadd.f32 0.0, %v974
        %976 = vmatprep.mubr.bf16.mxu0 0
        %977 = vmatmul.mubr.bf16.gmra.mrb[0].mxu0 %v779
        %v978 = vpop.f32.mrb[0].mxu0
        %v979 = vadd.f32 0.0, %v978
        %v980 = vpop.f32.mrb[0].mxu0
        %v981 = vadd.f32 0.0, %v980
        %v982 = vpop.f32.mrb[0].mxu0
        %v983 = vadd.f32 0.0, %v982
        %v984 = vpop.f32.mrb[0].mxu0
        %v985 = vadd.f32 0.0, %v984
        %986 = vmatprep.mubr.bf16.mxu0 0
        %987 = vmatmul.mubr.bf16.gmra.mrb[0].mxu0 %v782
        %v988 = vpop.f32.mrb[0].mxu0
        %v989 = vadd.f32 0.0, %v988
        %v990 = vpop.f32.mrb[0].mxu0
        %v991 = vadd.f32 0.0, %v990
        %v992 = vpop.f32.mrb[0].mxu0
        %v993 = vadd.f32 0.0, %v992
        %v994 = vpop.f32.mrb[0].mxu0
        %v995 = vadd.f32 0.0, %v994
        %996 = vmatprep.mubr.bf16.mxu0 0
        %997 = vmatmul.mubr.bf16.gmra.mrb[0].mxu0 %v785
        %v998 = vpop.f32.mrb[0].mxu0
        %v999 = vadd.f32 0.0, %v998
        %v1000 = vpop.f32.mrb[0].mxu0
        %v1001 = vadd.f32 0.0, %v1000
        %v1002 = vpop.f32.mrb[0].mxu0
        %v1003 = vadd.f32 0.0, %v1002
        %v1004 = vpop.f32.mrb[0].mxu0
        %v1005 = vadd.f32 0.0, %v1004
        %1006 = vmatprep.mubr.bf16.mxu0 0
        %1007 = vmatmul.mubr.bf16.gmra.mrb[0].mxu0 %v788
        %v1008 = vpop.f32.mrb[0].mxu0
        %v1009 = vadd.f32 0.0, %v1008
        %v1010 = vpop.f32.mrb[0].mxu0
        %v1011 = vadd.f32 0.0, %v1010
        %v1012 = vpop.f32.mrb[0].mxu0
        %v1013 = vadd.f32 0.0, %v1012
        %v1014 = vpop.f32.mrb[0].mxu0
        %v1015 = vadd.f32 0.0, %v1014
        %1016 = vmatprep.mubr.bf16.mxu0 0
        %1017 = vmatmul.mubr.bf16.gmra.mrb[0].mxu0 %v791
        %v1018 = vpop.f32.mrb[0].mxu0
        %v1019 = vadd.f32 0.0, %v1018
        %v1020 = vpop.f32.mrb[0].mxu0
        %v1021 = vadd.f32 0.0, %v1020
        %v1022 = vpop.f32.mrb[0].mxu0
        %v1023 = vadd.f32 0.0, %v1022
        %v1024 = vpop.f32.mrb[0].mxu0
        %v1025 = vadd.f32 0.0, %v1024
        %1026 = vmatprep.mubr.bf16.mxu0 0
        %1027 = vmatmul.mubr.bf16.gmra.mrb[0].mxu0 %v794
        %v1028 = vpop.f32.mrb[0].mxu0
        %v1029 = vadd.f32 0.0, %v1028
        %v1030 = vpop.f32.mrb[0].mxu0
        %v1031 = vadd.f32 0.0, %v1030
        %v1032 = vpop.f32.mrb[0].mxu0
        %v1033 = vadd.f32 0.0, %v1032
        %v1034 = vpop.f32.mrb[0].mxu0
        %v1035 = vadd.f32 0.0, %v1034
        %1036 = vmatprep.mubr.bf16.mxu0 0
        %1037 = vmatmul.mubr.bf16.gmra.mrb[0].mxu0 %v797
        %v1038 = vpop.f32.mrb[0].mxu0
        %v1039 = vadd.f32 0.0, %v1038
        %v1040 = vpop.f32.mrb[0].mxu0
        %v1041 = vadd.f32 0.0, %v1040
        %v1042 = vpop.f32.mrb[0].mxu0
        %v1043 = vadd.f32 0.0, %v1042
        %v1044 = vpop.f32.mrb[0].mxu0
        %v1045 = vadd.f32 0.0, %v1044
        %1046 = vmatprep.mubr.bf16.mxu0 0
        %1047 = vmatmul.mubr.bf16.gmra.mrb[0].mxu0 %v800
        %v1048 = vpop.f32.mrb[0].mxu0
        %v1049 = vadd.f32 0.0, %v1048
        %v1050 = vpop.f32.mrb[0].mxu0
        %v1051 = vadd.f32 0.0, %v1050
        %v1052 = vpop.f32.mrb[0].mxu0
        %v1053 = vadd.f32 0.0, %v1052
        %v1054 = vpop.f32.mrb[0].mxu0
        %v1055 = vadd.f32 0.0, %v1054
        %1056 = vmatprep.mubr.bf16.mxu0 0
        %1057 = vmatmul.mubr.bf16.gmra.mrb[0].mxu0 %v803
        %v1058 = vpop.f32.mrb[0].mxu0
        %v1059 = vadd.f32 0.0, %v1058
        %v1060 = vpop.f32.mrb[0].mxu0
        %v1061 = vadd.f32 0.0, %v1060
        %v1062 = vpop.f32.mrb[0].mxu0
        %v1063 = vadd.f32 0.0, %v1062
        %v1064 = vpop.f32.mrb[0].mxu0
        %v1065 = vadd.f32 0.0, %v1064
        %1066 = vmatprep.mubr.bf16.mxu0 0
        %1067 = vmatmul.mubr.bf16.gmra.mrb[0].mxu0 %v806
        %v1068 = vpop.f32.mrb[0].mxu0
        %v1069 = vadd.f32 0.0, %v1068
        %v1070 = vpop.f32.mrb[0].mxu0
        %v1071 = vadd.f32 0.0, %v1070
        %v1072 = vpop.f32.mrb[0].mxu0
        %v1073 = vadd.f32 0.0, %v1072
        %v1074 = vpop.f32.mrb[0].mxu0
        %v1075 = vadd.f32 0.0, %v1074
        %1076 = vmatprep.mubr.bf16.mxu0 0
        %1077 = vmatmul.mubr.bf16.gmra.mrb[0].mxu0 %v809
        %v1078 = vpop.f32.mrb[0].mxu0
        %v1079 = vadd.f32 0.0, %v1078
        %v1080 = vpop.f32.mrb[0].mxu0
        %v1081 = vadd.f32 0.0, %v1080
        %v1082 = vpop.f32.mrb[0].mxu0
        %v1083 = vadd.f32 0.0, %v1082
        %v1084 = vpop.f32.mrb[0].mxu0
        %v1085 = vadd.f32 0.0, %v1084
        %1086 = vmatprep.mubr.bf16.mxu0 0
        %1087 = vmatmul.mubr.bf16.gmra.mrb[0].mxu0 %v812
        %v1088 = vpop.f32.mrb[0].mxu0
        %v1089 = vadd.f32 0.0, %v1088
        %v1090 = vpop.f32.mrb[0].mxu0
        %v1091 = vadd.f32 0.0, %v1090
        %v1092 = vpop.f32.mrb[0].mxu0
        %v1093 = vadd.f32 0.0, %v1092
        %v1094 = vpop.f32.mrb[0].mxu0
        %v1095 = vadd.f32 0.0, %v1094
        %1096 = vmatprep.mubr.bf16.mxu0 0
        %1097 = vmatmul.mubr.bf16.gmra.mrb[0].mxu0 %v815
        %v1098 = vpop.f32.mrb[0].mxu0
        %v1099 = vadd.f32 0.0, %v1098
        %v1100 = vpop.f32.mrb[0].mxu0
        %v1101 = vadd.f32 0.0, %v1100
        %v1102 = vpop.f32.mrb[0].mxu0
        %v1103 = vadd.f32 0.0, %v1102
        %v1104 = vpop.f32.mrb[0].mxu0
        %v1105 = vadd.f32 0.0, %v1104
        %1106 = vmatprep.mubr.bf16.mxu0 0
        %1107 = vmatmul.mubr.bf16.gmra.mrb[0].mxu0 %v818
        %v1108 = vpop.f32.mrb[0].mxu0
        %v1109 = vadd.f32 0.0, %v1108
        %v1110 = vpop.f32.mrb[0].mxu0
        %v1111 = vadd.f32 0.0, %v1110
        %v1112 = vpop.f32.mrb[0].mxu0
        %v1113 = vadd.f32 0.0, %v1112
        %v1114 = vpop.f32.mrb[0].mxu0
        %v1115 = vadd.f32 0.0, %v1114
        %1116 = vmatprep.mubr.bf16.mxu0 0
        %1117 = vmatmul.mubr.bf16.gmra.mrb[0].mxu0 %v821
        %v1118 = vpop.f32.mrb[0].mxu0
        %v1119 = vadd.f32 0.0, %v1118
        %v1120 = vpop.f32.mrb[0].mxu0
        %v1121 = vadd.f32 0.0, %v1120
        %v1122 = vpop.f32.mrb[0].mxu0
        %v1123 = vadd.f32 0.0, %v1122
        %v1124 = vpop.f32.mrb[0].mxu0
        %v1125 = vadd.f32 0.0, %v1124
        %1126 = vmatprep.mubr.bf16.mxu0 0
        %1127 = vmatmul.mubr.bf16.gmra.mrb[0].mxu0 %v824
        %v1128 = vpop.f32.mrb[0].mxu0
        %v1129 = vadd.f32 0.0, %v1128
        %v1130 = vpop.f32.mrb[0].mxu0
        %v1131 = vadd.f32 0.0, %v1130
        %v1132 = vpop.f32.mrb[0].mxu0
        %v1133 = vadd.f32 0.0, %v1132
        %v1134 = vpop.f32.mrb[0].mxu0
        %v1135 = vadd.f32 0.0, %v1134
        %1136 = vmatprep.mubr.bf16.mxu0 0
        %1137 = vmatmul.mubr.bf16.gmra.mrb[0].mxu0 %v827
        %v1138 = vpop.f32.mrb[0].mxu0
        %v1139 = vadd.f32 0.0, %v1138
        %v1140 = vpop.f32.mrb[0].mxu0
        %v1141 = vadd.f32 0.0, %v1140
        %v1142 = vpop.f32.mrb[0].mxu0
        %v1143 = vadd.f32 0.0, %v1142
        %v1144 = vpop.f32.mrb[0].mxu0
        %v1145 = vadd.f32 0.0, %v1144
        %1146 = vmatprep.mubr.bf16.mxu0 0
        %1147 = vmatmul.mubr.bf16.gmra.mrb[0].mxu0 %v830
        %v1148 = vpop.f32.mrb[0].mxu0
        %v1149 = vadd.f32 0.0, %v1148
        %v1150 = vpop.f32.mrb[0].mxu0
        %v1151 = vadd.f32 0.0, %v1150
        %v1152 = vpop.f32.mrb[0].mxu0
        %v1153 = vadd.f32 0.0, %v1152
        %v1154 = vpop.f32.mrb[0].mxu0
        %v1155 = vadd.f32 0.0, %v1154
        %1156 = vmatprep.mubr.bf16.mxu0 0
        %1157 = vmatmul.mubr.bf16.gmra.mrb[0].mxu0 %v833
        %v1158 = vpop.f32.mrb[0].mxu0
        %v1159 = vadd.f32 0.0, %v1158
        %v1160 = vpop.f32.mrb[0].mxu0
        %v1161 = vadd.f32 0.0, %v1160
        %v1162 = vpop.f32.mrb[0].mxu0
        %v1163 = vadd.f32 0.0, %v1162
        %v1164 = vpop.f32.mrb[0].mxu0
        %v1165 = vadd.f32 0.0, %v1164
        %1166 = vmatprep.mubr.bf16.mxu0 0
        %1167 = vmatmul.mubr.bf16.gmra.mrb[0].mxu0 %v836
        %v1168 = vpop.f32.mrb[0].mxu0
        %v1169 = vadd.f32 0.0, %v1168
        %v1170 = vpop.f32.mrb[0].mxu0
        %v1171 = vadd.f32 0.0, %v1170
        %v1172 = vpop.f32.mrb[0].mxu0
        %v1173 = vadd.f32 0.0, %v1172
        %v1174 = vpop.f32.mrb[0].mxu0
        %v1175 = vadd.f32 0.0, %v1174
        %1176 = vmatprep.mubr.bf16.mxu0 0
        %1177 = vmatmul.mubr.bf16.gmra.mrb[0].mxu0 %v839
        %v1178 = vpop.f32.mrb[0].mxu0
        %v1179 = vadd.f32 0.0, %v1178
        %v1180 = vpop.f32.mrb[0].mxu0
        %v1181 = vadd.f32 0.0, %v1180
        %v1182 = vpop.f32.mrb[0].mxu0
        %v1183 = vadd.f32 0.0, %v1182
        %v1184 = vpop.f32.mrb[0].mxu0
        %v1185 = vadd.f32 0.0, %v1184
        %1186 = vmatprep.mubr.bf16.mxu0 0
        %1187 = vmatmul.mubr.bf16.gmra.mrb[0].mxu0 %v842
        %v1188 = vpop.f32.mrb[0].mxu0
        %v1189 = vadd.f32 0.0, %v1188
        %v1190 = vpop.f32.mrb[0].mxu0
        %v1191 = vadd.f32 0.0, %v1190
        %v1192 = vpop.f32.mrb[0].mxu0
        %v1193 = vadd.f32 0.0, %v1192
        %v1194 = vpop.f32.mrb[0].mxu0
        %v1195 = vadd.f32 0.0, %v1194
        %1196 = vmatprep.mubr.bf16.mxu0 0
        %1197 = vmatmul.mubr.bf16.gmra.mrb[0].mxu0 %v845
        %v1198 = vpop.f32.mrb[0].mxu0
        %v1199 = vadd.f32 0.0, %v1198
        %v1200 = vpop.f32.mrb[0].mxu0
        %v1201 = vadd.f32 0.0, %v1200
        %v1202 = vpop.f32.mrb[0].mxu0
        %v1203 = vadd.f32 0.0, %v1202
        %v1204 = vpop.f32.mrb[0].mxu0
        %v1205 = vadd.f32 0.0, %v1204
        %1206 = vdwg.mxu0
        %v1207 = vmax.f32 %v889, %v899
        %v1208 = vmax.f32 %v893, %v903
        %v1209 = vmax.f32 %v1207, %v909
        %v1210 = vmax.f32 %v1208, %v913
        %v1211 = vmax.f32 %v1209, %v919
        %v1212 = vmax.f32 %v1210, %v923
        %v1213 = vmax.f32 %v1211, %v929
        %v1214 = vmax.f32 %v1212, %v933
        %v1215 = vmax.f32 %v1213, %v939
        %v1216 = vmax.f32 %v1214, %v943
        %v1217 = vmax.f32 %v1215, %v949
        %v1218 = vmax.f32 %v1216, %v953
        %v1219 = vmax.f32 %v1217, %v959
        %v1220 = vmax.f32 %v1218, %v963
        %v1221 = vmax.f32 %v1219, %v969
        %v1222 = vmax.f32 %v1220, %v973
        %v1223 = vmax.f32 %v1221, %v979
        %v1224 = vmax.f32 %v1222, %v983
        %v1225 = vmax.f32 %v1223, %v989
        %v1226 = vmax.f32 %v1224, %v993
        %v1227 = vmax.f32 %v1225, %v999
        %v1228 = vmax.f32 %v1226, %v1003
        %v1229 = vmax.f32 %v1227, %v1009
        %v1230 = vmax.f32 %v1228, %v1013
        %v1231 = vmax.f32 %v1229, %v1019
        %v1232 = vmax.f32 %v1230, %v1023
        %v1233 = vmax.f32 %v1231, %v1029
        %v1234 = vmax.f32 %v1232, %v1033
        %v1235 = vmax.f32 %v1233, %v1039
        %v1236 = vmax.f32 %v1234, %v1043
        %v1237 = vmax.f32 %v1235, %v1049
        %v1238 = vmax.f32 %v1236, %v1053
        %v1239 = vmax.f32 %v1237, %v1059
        %v1240 = vmax.f32 %v1238, %v1063
        %v1241 = vmax.f32 %v1239, %v1069
        %v1242 = vmax.f32 %v1240, %v1073
        %v1243 = vmax.f32 %v1241, %v1079
        %v1244 = vmax.f32 %v1242, %v1083
        %v1245 = vmax.f32 %v1243, %v1089
        %v1246 = vmax.f32 %v1244, %v1093
        %v1247 = vmax.f32 %v1245, %v1099
        %v1248 = vmax.f32 %v1246, %v1103
        %v1249 = vmax.f32 %v1247, %v1109
        %v1250 = vmax.f32 %v1248, %v1113
        %v1251 = vmax.f32 %v1249, %v1119
        %v1252 = vmax.f32 %v1250, %v1123
        %v1253 = vmax.f32 %v1251, %v1129
        %v1254 = vmax.f32 %v1252, %v1133
        %v1255 = vmax.f32 %v1253, %v1139
        %v1256 = vmax.f32 %v1254, %v1143
        %v1257 = vmax.f32 %v1255, %v1149
        %v1258 = vmax.f32 %v1256, %v1153
        %v1259 = vmax.f32 %v1257, %v1159
        %v1260 = vmax.f32 %v1258, %v1163
        %v1261 = vmax.f32 %v1259, %v1169
        %v1262 = vmax.f32 %v1260, %v1173
        %v1263 = vmax.f32 %v1261, %v1179
        %v1264 = vmax.f32 %v1262, %v1183
        %v1265 = vmax.f32 %v1263, %v1189
        %v1266 = vmax.f32 %v1264, %v1193
        %v1267 = vmax.f32 %v1265, %v1199
        %v1268 = vmax.f32 %v1266, %v1203
        %v1269 = vmax.f32 %v1267, %v1268
        %v1270 = vrot.slane %v1269, 4
        %v1271 = vmax.f32 %v1269, %v1270
        %v1272 = vrot.slane %v1271, 2
        %v1273 = vmax.f32 %v1271, %v1272
        %v1274 = vrot.slane %v1273, 1
        %v1275 = vmax.f32 %v1273, %v1274
        %v1276 = vmax.f32 %v891, %v901
        %v1277 = vmax.f32 %v895, %v905
        %v1278 = vmax.f32 %v1276, %v911
        %v1279 = vmax.f32 %v1277, %v915
        %v1280 = vmax.f32 %v1278, %v921
        %v1281 = vmax.f32 %v1279, %v925
        %v1282 = vmax.f32 %v1280, %v931
        %v1283 = vmax.f32 %v1281, %v935
        %v1284 = vmax.f32 %v1282, %v941
        %v1285 = vmax.f32 %v1283, %v945
        %v1286 = vmax.f32 %v1284, %v951
        %v1287 = vmax.f32 %v1285, %v955
        %v1288 = vmax.f32 %v1286, %v961
        %v1289 = vmax.f32 %v1287, %v965
        %v1290 = vmax.f32 %v1288, %v971
        %v1291 = vmax.f32 %v1289, %v975
        %v1292 = vmax.f32 %v1290, %v981
        %v1293 = vmax.f32 %v1291, %v985
        %v1294 = vmax.f32 %v1292, %v991
        %v1295 = vmax.f32 %v1293, %v995
        %v1296 = vmax.f32 %v1294, %v1001
        %v1297 = vmax.f32 %v1295, %v1005
        %v1298 = vmax.f32 %v1296, %v1011
        %v1299 = vmax.f32 %v1297, %v1015
        %v1300 = vmax.f32 %v1298, %v1021
        %v1301 = vmax.f32 %v1299, %v1025
        %v1302 = vmax.f32 %v1300, %v1031
        %v1303 = vmax.f32 %v1301, %v1035
        %v1304 = vmax.f32 %v1302, %v1041
        %v1305 = vmax.f32 %v1303, %v1045
        %v1306 = vmax.f32 %v1304, %v1051
        %v1307 = vmax.f32 %v1305, %v1055
        %v1308 = vmax.f32 %v1306, %v1061
        %v1309 = vmax.f32 %v1307, %v1065
        %v1310 = vmax.f32 %v1308, %v1071
        %v1311 = vmax.f32 %v1309, %v1075
        %v1312 = vmax.f32 %v1310, %v1081
        %v1313 = vmax.f32 %v1311, %v1085
        %v1314 = vmax.f32 %v1312, %v1091
        %v1315 = vmax.f32 %v1313, %v1095
        %v1316 = vmax.f32 %v1314, %v1101
        %v1317 = vmax.f32 %v1315, %v1105
        %v1318 = vmax.f32 %v1316, %v1111
        %v1319 = vmax.f32 %v1317, %v1115
        %v1320 = vmax.f32 %v1318, %v1121
        %v1321 = vmax.f32 %v1319, %v1125
        %v1322 = vmax.f32 %v1320, %v1131
        %v1323 = vmax.f32 %v1321, %v1135
        %v1324 = vmax.f32 %v1322, %v1141
        %v1325 = vmax.f32 %v1323, %v1145
        %v1326 = vmax.f32 %v1324, %v1151
        %v1327 = vmax.f32 %v1325, %v1155
        %v1328 = vmax.f32 %v1326, %v1161
        %v1329 = vmax.f32 %v1327, %v1165
        %v1330 = vmax.f32 %v1328, %v1171
        %v1331 = vmax.f32 %v1329, %v1175
        %v1332 = vmax.f32 %v1330, %v1181
        %v1333 = vmax.f32 %v1331, %v1185
        %v1334 = vmax.f32 %v1332, %v1191
        %v1335 = vmax.f32 %v1333, %v1195
        %v1336 = vmax.f32 %v1334, %v1201
        %v1337 = vmax.f32 %v1335, %v1205
        %v1338 = vmax.f32 %v1336, %v1337
        %v1339 = vrot.slane %v1338, 4
        %v1340 = vmax.f32 %v1338, %v1339
        %v1341 = vrot.slane %v1340, 2
        %v1342 = vmax.f32 %v1340, %v1341
        %v1343 = vrot.slane %v1342, 1
        %v1344 = vmax.f32 %v1342, %v1343
        %v1345 = vsub.f32 %v889, %v1275
        %v1346 = vsub.f32 %v891, %v1344
        %v1347 = vsub.f32 %v893, %v1275
        %v1348 = vsub.f32 %v895, %v1344
        %v1349 = vsub.f32 %v899, %v1275
        %v1350 = vsub.f32 %v901, %v1344
        %v1351 = vsub.f32 %v903, %v1275
        %v1352 = vsub.f32 %v905, %v1344
        %v1353 = vsub.f32 %v909, %v1275
        %v1354 = vsub.f32 %v911, %v1344
        %v1355 = vsub.f32 %v913, %v1275
        %v1356 = vsub.f32 %v915, %v1344
        %v1357 = vsub.f32 %v919, %v1275
        %v1358 = vsub.f32 %v921, %v1344
        %v1359 = vsub.f32 %v923, %v1275
        %v1360 = vsub.f32 %v925, %v1344
        %v1361 = vsub.f32 %v929, %v1275
        %v1362 = vsub.f32 %v931, %v1344
        %v1363 = vsub.f32 %v933, %v1275
        %v1364 = vsub.f32 %v935, %v1344
        %v1365 = vsub.f32 %v939, %v1275
        %v1366 = vsub.f32 %v941, %v1344
        %v1367 = vsub.f32 %v943, %v1275
        %v1368 = vsub.f32 %v945, %v1344
        %v1369 = vsub.f32 %v949, %v1275
        %v1370 = vsub.f32 %v951, %v1344
        %v1371 = vsub.f32 %v953, %v1275
        %v1372 = vsub.f32 %v955, %v1344
        %v1373 = vsub.f32 %v959, %v1275
        %v1374 = vsub.f32 %v961, %v1344
        %v1375 = vsub.f32 %v963, %v1275
        %v1376 = vsub.f32 %v965, %v1344
        %v1377 = vsub.f32 %v969, %v1275
        %v1378 = vsub.f32 %v971, %v1344
        %v1379 = vsub.f32 %v973, %v1275
        %v1380 = vsub.f32 %v975, %v1344
        %v1381 = vsub.f32 %v979, %v1275
        %v1382 = vsub.f32 %v981, %v1344
        %v1383 = vsub.f32 %v983, %v1275
        %v1384 = vsub.f32 %v985, %v1344
        %v1385 = vsub.f32 %v989, %v1275
        %v1386 = vsub.f32 %v991, %v1344
        %v1387 = vsub.f32 %v993, %v1275
        %v1388 = vsub.f32 %v995, %v1344
        %v1389 = vsub.f32 %v999, %v1275
        %v1390 = vsub.f32 %v1001, %v1344
        %v1391 = vsub.f32 %v1003, %v1275
        %v1392 = vsub.f32 %v1005, %v1344
        %v1393 = vsub.f32 %v1009, %v1275
        %v1394 = vsub.f32 %v1011, %v1344
        %v1395 = vsub.f32 %v1013, %v1275
        %v1396 = vsub.f32 %v1015, %v1344
        %v1397 = vsub.f32 %v1019, %v1275
        %v1398 = vsub.f32 %v1021, %v1344
        %v1399 = vsub.f32 %v1023, %v1275
        %v1400 = vsub.f32 %v1025, %v1344
        %v1401 = vsub.f32 %v1029, %v1275
        %v1402 = vsub.f32 %v1031, %v1344
        %v1403 = vsub.f32 %v1033, %v1275
        %v1404 = vsub.f32 %v1035, %v1344
        %v1405 = vsub.f32 %v1039, %v1275
        %v1406 = vsub.f32 %v1041, %v1344
        %v1407 = vsub.f32 %v1043, %v1275
        %v1408 = vsub.f32 %v1045, %v1344
        %v1409 = vsub.f32 %v1049, %v1275
        %v1410 = vsub.f32 %v1051, %v1344
        %v1411 = vsub.f32 %v1053, %v1275
        %v1412 = vsub.f32 %v1055, %v1344
        %v1413 = vsub.f32 %v1059, %v1275
        %v1414 = vsub.f32 %v1061, %v1344
        %v1415 = vsub.f32 %v1063, %v1275
        %v1416 = vsub.f32 %v1065, %v1344
        %v1417 = vsub.f32 %v1069, %v1275
        %v1418 = vsub.f32 %v1071, %v1344
        %v1419 = vsub.f32 %v1073, %v1275
        %v1420 = vsub.f32 %v1075, %v1344
        %v1421 = vsub.f32 %v1079, %v1275
        %v1422 = vsub.f32 %v1081, %v1344
        %v1423 = vsub.f32 %v1083, %v1275
        %v1424 = vsub.f32 %v1085, %v1344
        %v1425 = vsub.f32 %v1089, %v1275
        %v1426 = vsub.f32 %v1091, %v1344
        %v1427 = vsub.f32 %v1093, %v1275
        %v1428 = vsub.f32 %v1095, %v1344
        %v1429 = vsub.f32 %v1099, %v1275
        %v1430 = vsub.f32 %v1101, %v1344
        %v1431 = vsub.f32 %v1103, %v1275
        %v1432 = vsub.f32 %v1105, %v1344
        %v1433 = vsub.f32 %v1109, %v1275
        %v1434 = vsub.f32 %v1111, %v1344
        %v1435 = vsub.f32 %v1113, %v1275
        %v1436 = vsub.f32 %v1115, %v1344
        %v1437 = vsub.f32 %v1119, %v1275
        %v1438 = vsub.f32 %v1121, %v1344
        %v1439 = vsub.f32 %v1123, %v1275
        %v1440 = vsub.f32 %v1125, %v1344
        %v1441 = vsub.f32 %v1129, %v1275
        %v1442 = vsub.f32 %v1131, %v1344
        %v1443 = vsub.f32 %v1133, %v1275
        %v1444 = vsub.f32 %v1135, %v1344
        %v1445 = vsub.f32 %v1139, %v1275
        %v1446 = vsub.f32 %v1141, %v1344
        %v1447 = vsub.f32 %v1143, %v1275
        %v1448 = vsub.f32 %v1145, %v1344
        %v1449 = vsub.f32 %v1149, %v1275
        %v1450 = vsub.f32 %v1151, %v1344
        %v1451 = vsub.f32 %v1153, %v1275
        %v1452 = vsub.f32 %v1155, %v1344
        %v1453 = vsub.f32 %v1159, %v1275
        %v1454 = vsub.f32 %v1161, %v1344
        %v1455 = vsub.f32 %v1163, %v1275
        %v1456 = vsub.f32 %v1165, %v1344
        %v1457 = vsub.f32 %v1169, %v1275
        %v1458 = vsub.f32 %v1171, %v1344
        %v1459 = vsub.f32 %v1173, %v1275
        %v1460 = vsub.f32 %v1175, %v1344
        %v1461 = vsub.f32 %v1179, %v1275
        %v1462 = vsub.f32 %v1181, %v1344
        %v1463 = vsub.f32 %v1183, %v1275
        %v1464 = vsub.f32 %v1185, %v1344
        %v1465 = vsub.f32 %v1189, %v1275
        %v1466 = vsub.f32 %v1191, %v1344
        %v1467 = vsub.f32 %v1193, %v1275
        %v1468 = vsub.f32 %v1195, %v1344
        %v1469 = vsub.f32 %v1199, %v1275
        %v1470 = vsub.f32 %v1201, %v1344
        %v1471 = vsub.f32 %v1203, %v1275
        %v1472 = vsub.f32 %v1205, %v1344
        %v1473 = vmul.f32 %v1345, 1.442695
        %v1474 = vpow.pop %v1473
        %v1475 = vmul.f32 %v1346, 1.442695
        %v1476 = vpow.pop %v1475
        %v1477 = vmul.f32 %v1347, 1.442695
        %v1478 = vpow.pop %v1477
        %v1479 = vmul.f32 %v1348, 1.442695
        %v1480 = vpow.pop %v1479
        %v1481 = vmul.f32 %v1349, 1.442695
        %v1482 = vpow.pop %v1481
        %v1483 = vmul.f32 %v1350, 1.442695
        %v1484 = vpow.pop %v1483
        %v1485 = vmul.f32 %v1351, 1.442695
        %v1486 = vpow.pop %v1485
        %v1487 = vmul.f32 %v1352, 1.442695
        %v1488 = vpow.pop %v1487
        %v1489 = vmul.f32 %v1353, 1.442695
        %v1490 = vpow.pop %v1489
        %v1491 = vmul.f32 %v1354, 1.442695
        %v1492 = vpow.pop %v1491
        %v1493 = vmul.f32 %v1355, 1.442695
        %v1494 = vpow.pop %v1493
        %v1495 = vmul.f32 %v1356, 1.442695
        %v1496 = vpow.pop %v1495
        %v1497 = vmul.f32 %v1357, 1.442695
        %v1498 = vpow.pop %v1497
        %v1499 = vmul.f32 %v1358, 1.442695
        %v1500 = vpow.pop %v1499
        %v1501 = vmul.f32 %v1359, 1.442695
        %v1502 = vpow.pop %v1501
        %v1503 = vmul.f32 %v1360, 1.442695
        %v1504 = vpow.pop %v1503
        %v1505 = vmul.f32 %v1361, 1.442695
        %v1506 = vpow.pop %v1505
        %v1507 = vmul.f32 %v1362, 1.442695
        %v1508 = vpow.pop %v1507
        %v1509 = vmul.f32 %v1363, 1.442695
        %v1510 = vpow.pop %v1509
        %v1511 = vmul.f32 %v1364, 1.442695
        %v1512 = vpow.pop %v1511
        %v1513 = vmul.f32 %v1365, 1.442695
        %v1514 = vpow.pop %v1513
        %v1515 = vmul.f32 %v1366, 1.442695
        %v1516 = vpow.pop %v1515
        %v1517 = vmul.f32 %v1367, 1.442695
        %v1518 = vpow.pop %v1517
        %v1519 = vmul.f32 %v1368, 1.442695
        %v1520 = vpow.pop %v1519
        %v1521 = vmul.f32 %v1369, 1.442695
        %v1522 = vpow.pop %v1521
        %v1523 = vmul.f32 %v1370, 1.442695
        %v1524 = vpow.pop %v1523
        %v1525 = vmul.f32 %v1371, 1.442695
        %v1526 = vpow.pop %v1525
        %v1527 = vmul.f32 %v1372, 1.442695
        %v1528 = vpow.pop %v1527
        %v1529 = vmul.f32 %v1373, 1.442695
        %v1530 = vpow.pop %v1529
        %v1531 = vmul.f32 %v1374, 1.442695
        %v1532 = vpow.pop %v1531
        %v1533 = vmul.f32 %v1375, 1.442695
        %v1534 = vpow.pop %v1533
        %v1535 = vmul.f32 %v1376, 1.442695
        %v1536 = vpow.pop %v1535
        %v1537 = vmul.f32 %v1377, 1.442695
        %v1538 = vpow.pop %v1537
        %v1539 = vmul.f32 %v1378, 1.442695
        %v1540 = vpow.pop %v1539
        %v1541 = vmul.f32 %v1379, 1.442695
        %v1542 = vpow.pop %v1541
        %v1543 = vmul.f32 %v1380, 1.442695
        %v1544 = vpow.pop %v1543
        %v1545 = vmul.f32 %v1381, 1.442695
        %v1546 = vpow.pop %v1545
        %v1547 = vmul.f32 %v1382, 1.442695
        %v1548 = vpow.pop %v1547
        %v1549 = vmul.f32 %v1383, 1.442695
        %v1550 = vpow.pop %v1549
        %v1551 = vmul.f32 %v1384, 1.442695
        %v1552 = vpow.pop %v1551
        %v1553 = vmul.f32 %v1385, 1.442695
        %v1554 = vpow.pop %v1553
        %v1555 = vmul.f32 %v1386, 1.442695
        %v1556 = vpow.pop %v1555
        %v1557 = vmul.f32 %v1387, 1.442695
        %v1558 = vpow.pop %v1557
        %v1559 = vmul.f32 %v1388, 1.442695
        %v1560 = vpow.pop %v1559
        %v1561 = vmul.f32 %v1389, 1.442695
        %v1562 = vpow.pop %v1561
        %v1563 = vmul.f32 %v1390, 1.442695
        %v1564 = vpow.pop %v1563
        %v1565 = vmul.f32 %v1391, 1.442695
        %v1566 = vpow.pop %v1565
        %v1567 = vmul.f32 %v1392, 1.442695
        %v1568 = vpow.pop %v1567
        %v1569 = vmul.f32 %v1393, 1.442695
        %v1570 = vpow.pop %v1569
        %v1571 = vmul.f32 %v1394, 1.442695
        %v1572 = vpow.pop %v1571
        %v1573 = vmul.f32 %v1395, 1.442695
        %v1574 = vpow.pop %v1573
        %v1575 = vmul.f32 %v1396, 1.442695
        %v1576 = vpow.pop %v1575
        %v1577 = vmul.f32 %v1397, 1.442695
        %v1578 = vpow.pop %v1577
        %v1579 = vmul.f32 %v1398, 1.442695
        %v1580 = vpow.pop %v1579
        %v1581 = vmul.f32 %v1399, 1.442695
        %v1582 = vpow.pop %v1581
        %v1583 = vmul.f32 %v1400, 1.442695
        %v1584 = vpow.pop %v1583
        %v1585 = vmul.f32 %v1401, 1.442695
        %v1586 = vpow.pop %v1585
        %v1587 = vmul.f32 %v1402, 1.442695
        %v1588 = vpow.pop %v1587
        %v1589 = vmul.f32 %v1403, 1.442695
        %v1590 = vpow.pop %v1589
        %v1591 = vmul.f32 %v1404, 1.442695
        %v1592 = vpow.pop %v1591
        %v1593 = vmul.f32 %v1405, 1.442695
        %v1594 = vpow.pop %v1593
        %v1595 = vmul.f32 %v1406, 1.442695
        %v1596 = vpow.pop %v1595
        %v1597 = vmul.f32 %v1407, 1.442695
        %v1598 = vpow.pop %v1597
        %v1599 = vmul.f32 %v1408, 1.442695
        %v1600 = vpow.pop %v1599
        %v1601 = vmul.f32 %v1409, 1.442695
        %v1602 = vpow.pop %v1601
        %v1603 = vmul.f32 %v1410, 1.442695
        %v1604 = vpow.pop %v1603
        %v1605 = vmul.f32 %v1411, 1.442695
        %v1606 = vpow.pop %v1605
        %v1607 = vmul.f32 %v1412, 1.442695
        %v1608 = vpow.pop %v1607
        %v1609 = vmul.f32 %v1413, 1.442695
        %v1610 = vpow.pop %v1609
        %v1611 = vmul.f32 %v1414, 1.442695
        %v1612 = vpow.pop %v1611
        %v1613 = vmul.f32 %v1415, 1.442695
        %v1614 = vpow.pop %v1613
        %v1615 = vmul.f32 %v1416, 1.442695
        %v1616 = vpow.pop %v1615
        %v1617 = vmul.f32 %v1417, 1.442695
        %v1618 = vpow.pop %v1617
        %v1619 = vmul.f32 %v1418, 1.442695
        %v1620 = vpow.pop %v1619
        %v1621 = vmul.f32 %v1419, 1.442695
        %v1622 = vpow.pop %v1621
        %v1623 = vmul.f32 %v1420, 1.442695
        %v1624 = vpow.pop %v1623
        %v1625 = vmul.f32 %v1421, 1.442695
        %v1626 = vpow.pop %v1625
        %v1627 = vmul.f32 %v1422, 1.442695
        %v1628 = vpow.pop %v1627
        %v1629 = vmul.f32 %v1423, 1.442695
        %v1630 = vpow.pop %v1629
        %v1631 = vmul.f32 %v1424, 1.442695
        %v1632 = vpow.pop %v1631
        %v1633 = vmul.f32 %v1425, 1.442695
        %v1634 = vpow.pop %v1633
        %v1635 = vmul.f32 %v1426, 1.442695
        %v1636 = vpow.pop %v1635
        %v1637 = vmul.f32 %v1427, 1.442695
        %v1638 = vpow.pop %v1637
        %v1639 = vmul.f32 %v1428, 1.442695
        %v1640 = vpow.pop %v1639
        %v1641 = vmul.f32 %v1429, 1.442695
        %v1642 = vpow.pop %v1641
        %v1643 = vmul.f32 %v1430, 1.442695
        %v1644 = vpow.pop %v1643
        %v1645 = vmul.f32 %v1431, 1.442695
        %v1646 = vpow.pop %v1645
        %v1647 = vmul.f32 %v1432, 1.442695
        %v1648 = vpow.pop %v1647
        %v1649 = vmul.f32 %v1433, 1.442695
        %v1650 = vpow.pop %v1649
        %v1651 = vmul.f32 %v1434, 1.442695
        %v1652 = vpow.pop %v1651
        %v1653 = vmul.f32 %v1435, 1.442695
        %v1654 = vpow.pop %v1653
        %v1655 = vmul.f32 %v1436, 1.442695
        %v1656 = vpow.pop %v1655
        %v1657 = vmul.f32 %v1437, 1.442695
        %v1658 = vpow.pop %v1657
        %v1659 = vmul.f32 %v1438, 1.442695
        %v1660 = vpow.pop %v1659
        %v1661 = vmul.f32 %v1439, 1.442695
        %v1662 = vpow.pop %v1661
        %v1663 = vmul.f32 %v1440, 1.442695
        %v1664 = vpow.pop %v1663
        %v1665 = vmul.f32 %v1441, 1.442695
        %v1666 = vpow.pop %v1665
        %v1667 = vmul.f32 %v1442, 1.442695
        %v1668 = vpow.pop %v1667
        %v1669 = vmul.f32 %v1443, 1.442695
        %v1670 = vpow.pop %v1669
        %v1671 = vmul.f32 %v1444, 1.442695
        %v1672 = vpow.pop %v1671
        %v1673 = vmul.f32 %v1445, 1.442695
        %v1674 = vpow.pop %v1673
        %v1675 = vmul.f32 %v1446, 1.442695
        %v1676 = vpow.pop %v1675
        %v1677 = vmul.f32 %v1447, 1.442695
        %v1678 = vpow.pop %v1677
        %v1679 = vmul.f32 %v1448, 1.442695
        %v1680 = vpow.pop %v1679
        %v1681 = vmul.f32 %v1449, 1.442695
        %v1682 = vpow.pop %v1681
        %v1683 = vmul.f32 %v1450, 1.442695
        %v1684 = vpow.pop %v1683
        %v1685 = vmul.f32 %v1451, 1.442695
        %v1686 = vpow.pop %v1685
        %v1687 = vmul.f32 %v1452, 1.442695
        %v1688 = vpow.pop %v1687
        %v1689 = vmul.f32 %v1453, 1.442695
        %v1690 = vpow.pop %v1689
        %v1691 = vmul.f32 %v1454, 1.442695
        %v1692 = vpow.pop %v1691
        %v1693 = vmul.f32 %v1455, 1.442695
        %v1694 = vpow.pop %v1693
        %v1695 = vmul.f32 %v1456, 1.442695
        %v1696 = vpow.pop %v1695
        %v1697 = vmul.f32 %v1457, 1.442695
        %v1698 = vpow.pop %v1697
        %v1699 = vmul.f32 %v1458, 1.442695
        %v1700 = vpow.pop %v1699
        %v1701 = vmul.f32 %v1459, 1.442695
        %v1702 = vpow.pop %v1701
        %v1703 = vmul.f32 %v1460, 1.442695
        %v1704 = vpow.pop %v1703
        %v1705 = vmul.f32 %v1461, 1.442695
        %v1706 = vpow.pop %v1705
        %v1707 = vmul.f32 %v1462, 1.442695
        %v1708 = vpow.pop %v1707
        %v1709 = vmul.f32 %v1463, 1.442695
        %v1710 = vpow.pop %v1709
        %v1711 = vmul.f32 %v1464, 1.442695
        %v1712 = vpow.pop %v1711
        %v1713 = vmul.f32 %v1465, 1.442695
        %v1714 = vpow.pop %v1713
        %v1715 = vmul.f32 %v1466, 1.442695
        %v1716 = vpow.pop %v1715
        %v1717 = vmul.f32 %v1467, 1.442695
        %v1718 = vpow.pop %v1717
        %v1719 = vmul.f32 %v1468, 1.442695
        %v1720 = vpow.pop %v1719
        %v1721 = vmul.f32 %v1469, 1.442695
        %v1722 = vpow.pop %v1721
        %v1723 = vmul.f32 %v1470, 1.442695
        %v1724 = vpow.pop %v1723
        %v1725 = vmul.f32 %v1471, 1.442695
        %v1726 = vpow.pop %v1725
        %v1727 = vmul.f32 %v1472, 1.442695
        %v1728 = vpow.pop %v1727
        %v1729 = vadd.f32 %v1474, %v1478
        %v1730 = vadd.f32 %v1729, %v1482
        %v1731 = vadd.f32 %v1730, %v1486
        %v1732 = vadd.f32 %v1731, %v1490
        %v1733 = vadd.f32 %v1732, %v1494
        %v1734 = vadd.f32 %v1733, %v1498
        %v1735 = vadd.f32 %v1734, %v1502
        %v1736 = vadd.f32 %v1735, %v1506
        %v1737 = vadd.f32 %v1736, %v1510
        %v1738 = vadd.f32 %v1737, %v1514
        %v1739 = vadd.f32 %v1738, %v1518
        %v1740 = vadd.f32 %v1739, %v1522
        %v1741 = vadd.f32 %v1740, %v1526
        %v1742 = vadd.f32 %v1741, %v1530
        %v1743 = vadd.f32 %v1742, %v1534
        %v1744 = vadd.f32 %v1743, %v1538
        %v1745 = vadd.f32 %v1744, %v1542
        %v1746 = vadd.f32 %v1745, %v1546
        %v1747 = vadd.f32 %v1746, %v1550
        %v1748 = vadd.f32 %v1747, %v1554
        %v1749 = vadd.f32 %v1748, %v1558
        %v1750 = vadd.f32 %v1749, %v1562
        %v1751 = vadd.f32 %v1750, %v1566
        %v1752 = vadd.f32 %v1751, %v1570
        %v1753 = vadd.f32 %v1752, %v1574
        %v1754 = vadd.f32 %v1753, %v1578
        %v1755 = vadd.f32 %v1754, %v1582
        %v1756 = vadd.f32 %v1755, %v1586
        %v1757 = vadd.f32 %v1756, %v1590
        %v1758 = vadd.f32 %v1757, %v1594
        %v1759 = vadd.f32 %v1758, %v1598
        %v1760 = vadd.f32 %v1759, %v1602
        %v1761 = vadd.f32 %v1760, %v1606
        %v1762 = vadd.f32 %v1761, %v1610
        %v1763 = vadd.f32 %v1762, %v1614
        %v1764 = vadd.f32 %v1763, %v1618
        %v1765 = vadd.f32 %v1764, %v1622
        %v1766 = vadd.f32 %v1765, %v1626
        %v1767 = vadd.f32 %v1766, %v1630
        %v1768 = vadd.f32 %v1767, %v1634
        %v1769 = vadd.f32 %v1768, %v1638
        %v1770 = vadd.f32 %v1769, %v1642
        %v1771 = vadd.f32 %v1770, %v1646
        %v1772 = vadd.f32 %v1771, %v1650
        %v1773 = vadd.f32 %v1772, %v1654
        %v1774 = vadd.f32 %v1773, %v1658
        %v1775 = vadd.f32 %v1774, %v1662
        %v1776 = vadd.f32 %v1775, %v1666
        %v1777 = vadd.f32 %v1776, %v1670
        %v1778 = vadd.f32 %v1777, %v1674
        %v1779 = vadd.f32 %v1778, %v1678
        %v1780 = vadd.f32 %v1779, %v1682
        %v1781 = vadd.f32 %v1780, %v1686
        %v1782 = vadd.f32 %v1781, %v1690
        %v1783 = vadd.f32 %v1782, %v1694
        %v1784 = vadd.f32 %v1783, %v1698
        %v1785 = vadd.f32 %v1784, %v1702
        %v1786 = vadd.f32 %v1785, %v1706
        %v1787 = vadd.f32 %v1786, %v1710
        %v1788 = vadd.f32 %v1787, %v1714
        %v1789 = vadd.f32 %v1788, %v1718
        %v1790 = vadd.f32 %v1789, %v1722
        %v1791 = vadd.f32 %v1790, %v1726
        %v1792 = vrot.slane %v1791, 4
        %v1793 = vadd.f32 %v1791, %v1792
        %v1794 = vrot.slane %v1793, 2
        %v1795 = vadd.f32 %v1793, %v1794
        %v1796 = vrot.slane %v1795, 1
        %v1797 = vadd.f32 %v1795, %v1796
        %v1798 = vadd.f32 %v1476, %v1480
        %v1799 = vadd.f32 %v1798, %v1484
        %v1800 = vadd.f32 %v1799, %v1488
        %v1801 = vadd.f32 %v1800, %v1492
        %v1802 = vadd.f32 %v1801, %v1496
        %v1803 = vadd.f32 %v1802, %v1500
        %v1804 = vadd.f32 %v1803, %v1504
        %v1805 = vadd.f32 %v1804, %v1508
        %v1806 = vadd.f32 %v1805, %v1512
        %v1807 = vadd.f32 %v1806, %v1516
        %v1808 = vadd.f32 %v1807, %v1520
        %v1809 = vadd.f32 %v1808, %v1524
        %v1810 = vadd.f32 %v1809, %v1528
        %v1811 = vadd.f32 %v1810, %v1532
        %v1812 = vadd.f32 %v1811, %v1536
        %v1813 = vadd.f32 %v1812, %v1540
        %v1814 = vadd.f32 %v1813, %v1544
        %v1815 = vadd.f32 %v1814, %v1548
        %v1816 = vadd.f32 %v1815, %v1552
        %v1817 = vadd.f32 %v1816, %v1556
        %v1818 = vadd.f32 %v1817, %v1560
        %v1819 = vadd.f32 %v1818, %v1564
        %v1820 = vadd.f32 %v1819, %v1568
        %v1821 = vadd.f32 %v1820, %v1572
        %v1822 = vadd.f32 %v1821, %v1576
        %v1823 = vadd.f32 %v1822, %v1580
        %v1824 = vadd.f32 %v1823, %v1584
        %v1825 = vadd.f32 %v1824, %v1588
        %v1826 = vadd.f32 %v1825, %v1592
        %v1827 = vadd.f32 %v1826, %v1596
        %v1828 = vadd.f32 %v1827, %v1600
        %v1829 = vadd.f32 %v1828, %v1604
        %v1830 = vadd.f32 %v1829, %v1608
        %v1831 = vadd.f32 %v1830, %v1612
        %v1832 = vadd.f32 %v1831, %v1616
        %v1833 = vadd.f32 %v1832, %v1620
        %v1834 = vadd.f32 %v1833, %v1624
        %v1835 = vadd.f32 %v1834, %v1628
        %v1836 = vadd.f32 %v1835, %v1632
        %v1837 = vadd.f32 %v1836, %v1636
        %v1838 = vadd.f32 %v1837, %v1640
        %v1839 = vadd.f32 %v1838, %v1644
        %v1840 = vadd.f32 %v1839, %v1648
        %v1841 = vadd.f32 %v1840, %v1652
        %v1842 = vadd.f32 %v1841, %v1656
        %v1843 = vadd.f32 %v1842, %v1660
        %v1844 = vadd.f32 %v1843, %v1664
        %v1845 = vadd.f32 %v1844, %v1668
        %v1846 = vadd.f32 %v1845, %v1672
        %v1847 = vadd.f32 %v1846, %v1676
        %v1848 = vadd.f32 %v1847, %v1680
        %v1849 = vadd.f32 %v1848, %v1684
        %v1850 = vadd.f32 %v1849, %v1688
        %v1851 = vadd.f32 %v1850, %v1692
        %v1852 = vadd.f32 %v1851, %v1696
        %v1853 = vadd.f32 %v1852, %v1700
        %v1854 = vadd.f32 %v1853, %v1704
        %v1855 = vadd.f32 %v1854, %v1708
        %v1856 = vadd.f32 %v1855, %v1712
        %v1857 = vadd.f32 %v1856, %v1716
        %v1858 = vadd.f32 %v1857, %v1720
        %v1859 = vadd.f32 %v1858, %v1724
        %v1860 = vadd.f32 %v1859, %v1728
        %v1861 = vrot.slane %v1860, 4
        %v1862 = vadd.f32 %v1860, %v1861
        %v1863 = vrot.slane %v1862, 2
        %v1864 = vadd.f32 %v1862, %v1863
        %v1865 = vrot.slane %v1864, 1
        %v1866 = vadd.f32 %v1864, %v1865
        %v1867 = vrcp.pop %v1797
        %v1868 = vrcp.pop %v1866
        %v1869 = vmul.f32 %v1474, %v1867
        %v1870 = vmul.f32 %v1476, %v1868
        %v1871 = vmul.f32 %v1478, %v1867
        %v1872 = vmul.f32 %v1480, %v1868
        %v1873 = vmul.f32 %v1482, %v1867
        %v1874 = vmul.f32 %v1484, %v1868
        %v1875 = vmul.f32 %v1486, %v1867
        %v1876 = vmul.f32 %v1488, %v1868
        %v1877 = vmul.f32 %v1490, %v1867
        %v1878 = vmul.f32 %v1492, %v1868
        %v1879 = vmul.f32 %v1494, %v1867
        %v1880 = vmul.f32 %v1496, %v1868
        %v1881 = vmul.f32 %v1498, %v1867
        %v1882 = vmul.f32 %v1500, %v1868
        %v1883 = vmul.f32 %v1502, %v1867
        %v1884 = vmul.f32 %v1504, %v1868
        %v1885 = vmul.f32 %v1506, %v1867
        %v1886 = vmul.f32 %v1508, %v1868
        %v1887 = vmul.f32 %v1510, %v1867
        %v1888 = vmul.f32 %v1512, %v1868
        %v1889 = vmul.f32 %v1514, %v1867
        %v1890 = vmul.f32 %v1516, %v1868
        %v1891 = vmul.f32 %v1518, %v1867
        %v1892 = vmul.f32 %v1520, %v1868
        %v1893 = vmul.f32 %v1522, %v1867
        %v1894 = vmul.f32 %v1524, %v1868
        %v1895 = vmul.f32 %v1526, %v1867
        %v1896 = vmul.f32 %v1528, %v1868
        %v1897 = vmul.f32 %v1530, %v1867
        %v1898 = vmul.f32 %v1532, %v1868
        %v1899 = vmul.f32 %v1534, %v1867
        %v1900 = vmul.f32 %v1536, %v1868
        %v1901 = vmul.f32 %v1538, %v1867
        %v1902 = vmul.f32 %v1540, %v1868
        %v1903 = vmul.f32 %v1542, %v1867
        %v1904 = vmul.f32 %v1544, %v1868
        %v1905 = vmul.f32 %v1546, %v1867
        %v1906 = vmul.f32 %v1548, %v1868
        %v1907 = vmul.f32 %v1550, %v1867
        %v1908 = vmul.f32 %v1552, %v1868
        %v1909 = vmul.f32 %v1554, %v1867
        %v1910 = vmul.f32 %v1556, %v1868
        %v1911 = vmul.f32 %v1558, %v1867
        %v1912 = vmul.f32 %v1560, %v1868
        %v1913 = vmul.f32 %v1562, %v1867
        %v1914 = vmul.f32 %v1564, %v1868
        %v1915 = vmul.f32 %v1566, %v1867
        %v1916 = vmul.f32 %v1568, %v1868
        %v1917 = vmul.f32 %v1570, %v1867
        %v1918 = vmul.f32 %v1572, %v1868
        %v1919 = vmul.f32 %v1574, %v1867
        %v1920 = vmul.f32 %v1576, %v1868
        %v1921 = vmul.f32 %v1578, %v1867
        %v1922 = vmul.f32 %v1580, %v1868
        %v1923 = vmul.f32 %v1582, %v1867
        %v1924 = vmul.f32 %v1584, %v1868
        %v1925 = vmul.f32 %v1586, %v1867
        %v1926 = vmul.f32 %v1588, %v1868
        %v1927 = vmul.f32 %v1590, %v1867
        %v1928 = vmul.f32 %v1592, %v1868
        %v1929 = vmul.f32 %v1594, %v1867
        %v1930 = vmul.f32 %v1596, %v1868
        %v1931 = vmul.f32 %v1598, %v1867
        %v1932 = vmul.f32 %v1600, %v1868
        %v1933 = vmul.f32 %v1602, %v1867
        %v1934 = vmul.f32 %v1604, %v1868
        %v1935 = vmul.f32 %v1606, %v1867
        %v1936 = vmul.f32 %v1608, %v1868
        %v1937 = vmul.f32 %v1610, %v1867
        %v1938 = vmul.f32 %v1612, %v1868
        %v1939 = vmul.f32 %v1614, %v1867
        %v1940 = vmul.f32 %v1616, %v1868
        %v1941 = vmul.f32 %v1618, %v1867
        %v1942 = vmul.f32 %v1620, %v1868
        %v1943 = vmul.f32 %v1622, %v1867
        %v1944 = vmul.f32 %v1624, %v1868
        %v1945 = vmul.f32 %v1626, %v1867
        %v1946 = vmul.f32 %v1628, %v1868
        %v1947 = vmul.f32 %v1630, %v1867
        %v1948 = vmul.f32 %v1632, %v1868
        %v1949 = vmul.f32 %v1634, %v1867
        %v1950 = vmul.f32 %v1636, %v1868
        %v1951 = vmul.f32 %v1638, %v1867
        %v1952 = vmul.f32 %v1640, %v1868
        %v1953 = vmul.f32 %v1642, %v1867
        %v1954 = vmul.f32 %v1644, %v1868
        %v1955 = vmul.f32 %v1646, %v1867
        %v1956 = vmul.f32 %v1648, %v1868
        %v1957 = vmul.f32 %v1650, %v1867
        %v1958 = vmul.f32 %v1652, %v1868
        %v1959 = vmul.f32 %v1654, %v1867
        %v1960 = vmul.f32 %v1656, %v1868
        %v1961 = vmul.f32 %v1658, %v1867
        %v1962 = vmul.f32 %v1660, %v1868
        %v1963 = vmul.f32 %v1662, %v1867
        %v1964 = vmul.f32 %v1664, %v1868
        %v1965 = vmul.f32 %v1666, %v1867
        %v1966 = vmul.f32 %v1668, %v1868
        %v1967 = vmul.f32 %v1670, %v1867
        %v1968 = vmul.f32 %v1672, %v1868
        %v1969 = vmul.f32 %v1674, %v1867
        %v1970 = vmul.f32 %v1676, %v1868
        %v1971 = vmul.f32 %v1678, %v1867
        %v1972 = vmul.f32 %v1680, %v1868
        %v1973 = vmul.f32 %v1682, %v1867
        %v1974 = vmul.f32 %v1684, %v1868
        %v1975 = vmul.f32 %v1686, %v1867
        %v1976 = vmul.f32 %v1688, %v1868
        %v1977 = vmul.f32 %v1690, %v1867
        %v1978 = vmul.f32 %v1692, %v1868
        %v1979 = vmul.f32 %v1694, %v1867
        %v1980 = vmul.f32 %v1696, %v1868
        %v1981 = vmul.f32 %v1698, %v1867
        %v1982 = vmul.f32 %v1700, %v1868
        %v1983 = vmul.f32 %v1702, %v1867
        %v1984 = vmul.f32 %v1704, %v1868
        %v1985 = vmul.f32 %v1706, %v1867
        %v1986 = vmul.f32 %v1708, %v1868
        %v1987 = vmul.f32 %v1710, %v1867
        %v1988 = vmul.f32 %v1712, %v1868
        %v1989 = vmul.f32 %v1714, %v1867
        %v1990 = vmul.f32 %v1716, %v1868
        %v1991 = vmul.f32 %v1718, %v1867
        %v1992 = vmul.f32 %v1720, %v1868
        %v1993 = vmul.f32 %v1722, %v1867
        %v1994 = vmul.f32 %v1724, %v1868
        %v1995 = vmul.f32 %v1726, %v1867
        %v1996 = vmul.f32 %v1728, %v1868
        %v1997 = vpack.c.bf16 %v1871, %v1869
        %v1998 = vpack.c.bf16 %v1872, %v1870
        %v1999 = vpack.c.bf16 %v1875, %v1873
        %v2000 = vpack.c.bf16 %v1876, %v1874
        %v2001 = vpack.c.bf16 %v1879, %v1877
        %v2002 = vpack.c.bf16 %v1880, %v1878
        %v2003 = vpack.c.bf16 %v1883, %v1881
        %v2004 = vpack.c.bf16 %v1884, %v1882
        %v2005 = vpack.c.bf16 %v1887, %v1885
        %v2006 = vpack.c.bf16 %v1888, %v1886
        %v2007 = vpack.c.bf16 %v1891, %v1889
        %v2008 = vpack.c.bf16 %v1892, %v1890
        %v2009 = vpack.c.bf16 %v1895, %v1893
        %v2010 = vpack.c.bf16 %v1896, %v1894
        %v2011 = vpack.c.bf16 %v1899, %v1897
        %v2012 = vpack.c.bf16 %v1900, %v1898
        %v2013 = vpack.c.bf16 %v1903, %v1901
        %v2014 = vpack.c.bf16 %v1904, %v1902
        %v2015 = vpack.c.bf16 %v1907, %v1905
        %v2016 = vpack.c.bf16 %v1908, %v1906
        %v2017 = vpack.c.bf16 %v1911, %v1909
        %v2018 = vpack.c.bf16 %v1912, %v1910
        %v2019 = vpack.c.bf16 %v1915, %v1913
        %v2020 = vpack.c.bf16 %v1916, %v1914
        %v2021 = vpack.c.bf16 %v1919, %v1917
        %v2022 = vpack.c.bf16 %v1920, %v1918
        %v2023 = vpack.c.bf16 %v1923, %v1921
        %v2024 = vpack.c.bf16 %v1924, %v1922
        %v2025 = vpack.c.bf16 %v1927, %v1925
        %v2026 = vpack.c.bf16 %v1928, %v1926
        %v2027 = vpack.c.bf16 %v1931, %v1929
        %v2028 = vpack.c.bf16 %v1932, %v1930
        %v2029 = vpack.c.bf16 %v1935, %v1933
        %v2030 = vpack.c.bf16 %v1936, %v1934
        %v2031 = vpack.c.bf16 %v1939, %v1937
        %v2032 = vpack.c.bf16 %v1940, %v1938
        %v2033 = vpack.c.bf16 %v1943, %v1941
        %v2034 = vpack.c.bf16 %v1944, %v1942
        %v2035 = vpack.c.bf16 %v1947, %v1945
        %v2036 = vpack.c.bf16 %v1948, %v1946
        %v2037 = vpack.c.bf16 %v1951, %v1949
        %v2038 = vpack.c.bf16 %v1952, %v1950
        %v2039 = vpack.c.bf16 %v1955, %v1953
        %v2040 = vpack.c.bf16 %v1956, %v1954
        %v2041 = vpack.c.bf16 %v1959, %v1957
        %v2042 = vpack.c.bf16 %v1960, %v1958
        %v2043 = vpack.c.bf16 %v1963, %v1961
        %v2044 = vpack.c.bf16 %v1964, %v1962
        %v2045 = vpack.c.bf16 %v1967, %v1965
        %v2046 = vpack.c.bf16 %v1968, %v1966
        %v2047 = vpack.c.bf16 %v1971, %v1969
        %v2048 = vpack.c.bf16 %v1972, %v1970
        %v2049 = vpack.c.bf16 %v1975, %v1973
        %v2050 = vpack.c.bf16 %v1976, %v1974
        %v2051 = vpack.c.bf16 %v1979, %v1977
        %v2052 = vpack.c.bf16 %v1980, %v1978
        %v2053 = vpack.c.bf16 %v1983, %v1981
        %v2054 = vpack.c.bf16 %v1984, %v1982
        %v2055 = vpack.c.bf16 %v1987, %v1985
        %v2056 = vpack.c.bf16 %v1988, %v1986
        %v2057 = vpack.c.bf16 %v1991, %v1989
        %v2058 = vpack.c.bf16 %v1992, %v1990
        %v2059 = vpack.c.bf16 %v1995, %v1993
        %v2060 = vpack.c.bf16 %v1996, %v1994
        %v2061 = vld [vmem:[#allocation4] sm:$0xff]
        %v2062 = vld [vmem:[#allocation4 + $0x8] sm:$0xff]
        %v2063 = vld [vmem:[#allocation4 + $0x10] sm:$0xff]
        %v2064 = vld [vmem:[#allocation4 + $0x18] sm:$0xff]
        %v2065 = vld [vmem:[#allocation4 + $0x20] sm:$0xff]
        %v2066 = vld [vmem:[#allocation4 + $0x28] sm:$0xff]
        %v2067 = vld [vmem:[#allocation4 + $0x30] sm:$0xff]
        %v2068 = vld [vmem:[#allocation4 + $0x38] sm:$0xff]
        %v2069 = vld [vmem:[#allocation4 + $0x40] sm:$0xff]
        %v2070 = vld [vmem:[#allocation4 + $0x48] sm:$0xff]
        %v2071 = vld [vmem:[#allocation4 + $0x50] sm:$0xff]
        %v2072 = vld [vmem:[#allocation4 + $0x58] sm:$0xff]
        %v2073 = vld [vmem:[#allocation4 + $0x60] sm:$0xff]
        %v2074 = vld [vmem:[#allocation4 + $0x68] sm:$0xff]
        %v2075 = vld [vmem:[#allocation4 + $0x70] sm:$0xff]
        %v2076 = vld [vmem:[#allocation4 + $0x78] sm:$0xff]
        %2077 = vmatprep.subr.bf16.mxu0 %v1998
        %2078 = vmatpush1.bf16.msra.mxu0 %v1997
        %2079 = vmatprep.subr.bf16.mxu0 %v2000
        %2080 = vmatpush1.bf16.msra.mxu0 %v1999
        %2081 = vmatprep.subr.bf16.mxu0 %v2002
        %2082 = vmatpush1.bf16.msra.mxu0 %v2001
        %2083 = vmatprep.subr.bf16.mxu0 %v2004
        %2084 = vmatpush1.bf16.msra.mxu0 %v2003
        %2085 = vmatprep.subr.bf16.mxu0 %v2006
        %2086 = vmatpush1.bf16.msra.mxu0 %v2005
        %2087 = vmatprep.subr.bf16.mxu0 %v2008
        %2088 = vmatpush1.bf16.msra.mxu0 %v2007
        %2089 = vmatprep.subr.bf16.mxu0 %v2010
        %2090 = vmatpush1.bf16.msra.mxu0 %v2009
        %2091 = vmatprep.subr.bf16.mxu0 %v2012
        %2092 = vmatpush1.bf16.msra.mxu0 %v2011
        %2093 = vmatprep.subr.bf16.mxu0 %v2014
        %2094 = vmatpush1.bf16.msra.mxu0 %v2013
        %2095 = vmatprep.subr.bf16.mxu0 %v2016
        %2096 = vmatpush1.bf16.msra.mxu0 %v2015
        %2097 = vmatprep.subr.bf16.mxu0 %v2018
        %2098 = vmatpush1.bf16.msra.mxu0 %v2017
        %2099 = vmatprep.subr.bf16.mxu0 %v2020
        %2100 = vmatpush1.bf16.msra.mxu0 %v2019
        %2101 = vmatprep.subr.bf16.mxu0 %v2022
        %2102 = vmatpush1.bf16.msra.mxu0 %v2021
        %2103 = vmatprep.subr.bf16.mxu0 %v2024
        %2104 = vmatpush1.bf16.msra.mxu0 %v2023
        %2105 = vmatprep.subr.bf16.mxu0 %v2026
        %2106 = vmatpush1.bf16.msra.mxu0 %v2025
        %2107 = vmatprep.subr.bf16.mxu0 %v2028
        %2108 = vmatpush1.bf16.msra.mxu0 %v2027
        %2109 = vmatprep.mubr.bf16.mxu0 %v2062
        %2110 = vmatmul.mubr.bf16.gmra.mrb[0].mxu0 %v2061
        %v2111 = vpop.f32.mrb[0].mxu0
        %v2112 = vadd.f32 0.0, %v2111
        %v2113 = vpop.f32.mrb[0].mxu0
        %v2114 = vadd.f32 0.0, %v2113
        %v2115 = vpop.f32.mrb[0].mxu0
        %v2116 = vadd.f32 0.0, %v2115
        %v2117 = vpop.f32.mrb[0].mxu0
        %v2118 = vadd.f32 0.0, %v2117
        %2119 = vmatprep.mubr.bf16.mxu0 %v2066
        %2120 = vmatmul.mubr.bf16.gmra.mrb[0].mxu0 %v2065
        %v2121 = vpop.f32.mrb[0].mxu0
        %v2122 = vadd.f32 0.0, %v2121
        %v2123 = vpop.f32.mrb[0].mxu0
        %v2124 = vadd.f32 0.0, %v2123
        %v2125 = vpop.f32.mrb[0].mxu0
        %v2126 = vadd.f32 0.0, %v2125
        %v2127 = vpop.f32.mrb[0].mxu0
        %v2128 = vadd.f32 0.0, %v2127
        %2129 = vmatprep.mubr.bf16.mxu0 %v2070
        %2130 = vmatmul.mubr.bf16.gmra.mrb[0].mxu0 %v2069
        %v2131 = vpop.f32.mrb[0].mxu0
        %v2132 = vadd.f32 0.0, %v2131
        %v2133 = vpop.f32.mrb[0].mxu0
        %v2134 = vadd.f32 0.0, %v2133
        %v2135 = vpop.f32.mrb[0].mxu0
        %v2136 = vadd.f32 0.0, %v2135
        %v2137 = vpop.f32.mrb[0].mxu0
        %v2138 = vadd.f32 0.0, %v2137
        %2139 = vmatprep.mubr.bf16.mxu0 %v2074
        %2140 = vmatmul.mubr.bf16.gmra.mrb[0].mxu0 %v2073
        %v2141 = vpop.f32.mrb[0].mxu0
        %v2142 = vadd.f32 0.0, %v2141
        %v2143 = vpop.f32.mrb[0].mxu0
        %v2144 = vadd.f32 0.0, %v2143
        %v2145 = vpop.f32.mrb[0].mxu0
        %v2146 = vadd.f32 0.0, %v2145
        %v2147 = vpop.f32.mrb[0].mxu0
        %v2148 = vadd.f32 0.0, %v2147
        %2149 = vdwg.mxu0
        %2150 = vmatprep.subr.bf16.mxu0 %v2030
        %2151 = vmatpush1.bf16.msra.mxu0 %v2029
        %2152 = vmatprep.subr.bf16.mxu0 %v2032
        %2153 = vmatpush1.bf16.msra.mxu0 %v2031
        %2154 = vmatprep.subr.bf16.mxu0 %v2034
        %2155 = vmatpush1.bf16.msra.mxu0 %v2033
        %2156 = vmatprep.subr.bf16.mxu0 %v2036
        %2157 = vmatpush1.bf16.msra.mxu0 %v2035
        %2158 = vmatprep.subr.bf16.mxu0 %v2038
        %2159 = vmatpush1.bf16.msra.mxu0 %v2037
        %2160 = vmatprep.subr.bf16.mxu0 %v2040
        %2161 = vmatpush1.bf16.msra.mxu0 %v2039
        %2162 = vmatprep.subr.bf16.mxu0 %v2042
        %2163 = vmatpush1.bf16.msra.mxu0 %v2041
        %2164 = vmatprep.subr.bf16.mxu0 %v2044
        %2165 = vmatpush1.bf16.msra.mxu0 %v2043
        %2166 = vmatprep.subr.bf16.mxu0 %v2046
        %2167 = vmatpush1.bf16.msra.mxu0 %v2045
        %2168 = vmatprep.subr.bf16.mxu0 %v2048
        %2169 = vmatpush1.bf16.msra.mxu0 %v2047
        %2170 = vmatprep.subr.bf16.mxu0 %v2050
        %2171 = vmatpush1.bf16.msra.mxu0 %v2049
        %2172 = vmatprep.subr.bf16.mxu0 %v2052
        %2173 = vmatpush1.bf16.msra.mxu0 %v2051
        %2174 = vmatprep.subr.bf16.mxu0 %v2054
        %2175 = vmatpush1.bf16.msra.mxu0 %v2053
        %2176 = vmatprep.subr.bf16.mxu0 %v2056
        %2177 = vmatpush1.bf16.msra.mxu0 %v2055
        %2178 = vmatprep.subr.bf16.mxu0 %v2058
        %2179 = vmatpush1.bf16.msra.mxu0 %v2057
        %2180 = vmatprep.subr.bf16.mxu0 %v2060
        %2181 = vmatpush1.bf16.msra.mxu0 %v2059
        %2182 = vmatprep.mubr.bf16.mxu0 %v2064
        %2183 = vmatmul.mubr.bf16.gmra.mrb[0].mxu0 %v2063
        %v2184 = vpop.f32.mrb[0].mxu0
        %v2185 = vadd.f32 %v2112, %v2184
        %v2186 = vpop.f32.mrb[0].mxu0
        %v2187 = vadd.f32 %v2114, %v2186
        %v2188 = vpop.f32.mrb[0].mxu0
        %v2189 = vadd.f32 %v2116, %v2188
        %v2190 = vpop.f32.mrb[0].mxu0
        %v2191 = vadd.f32 %v2118, %v2190
        %2192 = vmatprep.mubr.bf16.mxu0 %v2068
        %2193 = vmatmul.mubr.bf16.gmra.mrb[0].mxu0 %v2067
        %v2194 = vpop.f32.mrb[0].mxu0
        %v2195 = vadd.f32 %v2122, %v2194
        %v2196 = vpop.f32.mrb[0].mxu0
        %v2197 = vadd.f32 %v2124, %v2196
        %v2198 = vpop.f32.mrb[0].mxu0
        %v2199 = vadd.f32 %v2126, %v2198
        %v2200 = vpop.f32.mrb[0].mxu0
        %v2201 = vadd.f32 %v2128, %v2200
        %2202 = vmatprep.mubr.bf16.mxu0 %v2072
        %2203 = vmatmul.mubr.bf16.gmra.mrb[0].mxu0 %v2071
        %v2204 = vpop.f32.mrb[0].mxu0
        %v2205 = vadd.f32 %v2132, %v2204
        %v2206 = vpop.f32.mrb[0].mxu0
        %v2207 = vadd.f32 %v2134, %v2206
        %v2208 = vpop.f32.mrb[0].mxu0
        %v2209 = vadd.f32 %v2136, %v2208
        %v2210 = vpop.f32.mrb[0].mxu0
        %v2211 = vadd.f32 %v2138, %v2210
        %2212 = vmatprep.mubr.bf16.mxu0 %v2076
        %2213 = vmatmul.mubr.bf16.gmra.mrb[0].mxu0 %v2075
        %v2214 = vpop.f32.mrb[0].mxu0
        %v2215 = vadd.f32 %v2142, %v2214
        %v2216 = vpop.f32.mrb[0].mxu0
        %v2217 = vadd.f32 %v2144, %v2216
        %v2218 = vpop.f32.mrb[0].mxu0
        %v2219 = vadd.f32 %v2146, %v2218
        %v2220 = vpop.f32.mrb[0].mxu0
        %v2221 = vadd.f32 %v2148, %v2220
        %2222 = vdwg.mxu0
        %s2223 = sld [smem:[#allocation5]]
        %s2224 = smul.addr %s660, 8
        %s2225 = scalar_lea.vmem %s227, %s2224 [#allocation6]
        %v2226 = vld [vmem:[%s2225] sm:$0xff]
        %v2227 = vld [vmem:[%s2225 + $0x8] sm:$0xff]
        %v2228 = vld [vmem:[%s2225 + $0x20] sm:$0xff]
        %v2229 = vld [vmem:[%s2225 + $0x28] sm:$0xff]
        %v2230 = vld [vmem:[%s2225 + $0x40] sm:$0xff]
        %v2231 = vld [vmem:[%s2225 + $0x48] sm:$0xff]
        %v2232 = vld [vmem:[%s2225 + $0x60] sm:$0xff]
        %v2233 = vld [vmem:[%s2225 + $0x68] sm:$0xff]
        %v2234 = vld [vmem:[%s2225 + $0x80] sm:$0xff]
        %v2235 = vld [vmem:[%s2225 + $0x88] sm:$0xff]
        %v2236 = vld [vmem:[%s2225 + $0xa0] sm:$0xff]
        %v2237 = vld [vmem:[%s2225 + $0xa8] sm:$0xff]
        %v2238 = vld [vmem:[%s2225 + $0xc0] sm:$0xff]
        %v2239 = vld [vmem:[%s2225 + $0xc8] sm:$0xff]
        %v2240 = vld [vmem:[%s2225 + $0xe0] sm:$0xff]
        %v2241 = vld [vmem:[%s2225 + $0xe8] sm:$0xff]
        %v2242 = vstv %s2223
        %v2243 = vmul.f32 %v2242, %v2185
        %v2244 = vmul.f32 %v2242, %v2187
        %v2245 = vmul.f32 %v2242, %v2189
        %v2246 = vmul.f32 %v2242, %v2191
        %v2247 = vmul.f32 %v2242, %v2195
        %v2248 = vmul.f32 %v2242, %v2197
        %v2249 = vmul.f32 %v2242, %v2199
        %v2250 = vmul.f32 %v2242, %v2201
        %v2251 = vmul.f32 %v2242, %v2205
        %v2252 = vmul.f32 %v2242, %v2207
        %v2253 = vmul.f32 %v2242, %v2209
        %v2254 = vmul.f32 %v2242, %v2211
        %v2255 = vmul.f32 %v2242, %v2215
        %v2256 = vmul.f32 %v2242, %v2217
        %v2257 = vmul.f32 %v2242, %v2219
        %v2258 = vmul.f32 %v2242, %v2221
        %v2259 = vadd.f32 %v2243, %v2226
        %v2260 = vadd.f32 %v2244, %v2227
        %v2261 = vadd.f32 %v2245, %v2228
        %v2262 = vadd.f32 %v2246, %v2229
        %v2263 = vadd.f32 %v2247, %v2230
        %v2264 = vadd.f32 %v2248, %v2231
        %v2265 = vadd.f32 %v2249, %v2232
        %v2266 = vadd.f32 %v2250, %v2233
        %v2267 = vadd.f32 %v2251, %v2234
        %v2268 = vadd.f32 %v2252, %v2235
        %v2269 = vadd.f32 %v2253, %v2236
        %v2270 = vadd.f32 %v2254, %v2237
        %v2271 = vadd.f32 %v2255, %v2238
        %v2272 = vadd.f32 %v2256, %v2239
        %v2273 = vadd.f32 %v2257, %v2240
        %v2274 = vadd.f32 %v2258, %v2241
        %2275 = vst [vmem:[%s259] sm:$0xff] %v2259
        %2276 = vst [vmem:[%s259 + $0x8] sm:$0xff] %v2260
        %2277 = vst [vmem:[%s259 + $0x10] sm:$0xff] %v2261
        %2278 = vst [vmem:[%s259 + $0x18] sm:$0xff] %v2262
        %2279 = vst [vmem:[%s259 + $0x20] sm:$0xff] %v2263
        %2280 = vst [vmem:[%s259 + $0x28] sm:$0xff] %v2264
        %2281 = vst [vmem:[%s259 + $0x30] sm:$0xff] %v2265
        %2282 = vst [vmem:[%s259 + $0x38] sm:$0xff] %v2266
        %2283 = vst [vmem:[%s259 + $0x40] sm:$0xff] %v2267
        %2284 = vst [vmem:[%s259 + $0x48] sm:$0xff] %v2268
        %2285 = vst [vmem:[%s259 + $0x50] sm:$0xff] %v2269
        %2286 = vst [vmem:[%s259 + $0x58] sm:$0xff] %v2270
        %2287 = vst [vmem:[%s259 + $0x60] sm:$0xff] %v2271
        %2288 = vst [vmem:[%s259 + $0x68] sm:$0xff] %v2272
        %2289 = vst [vmem:[%s259 + $0x70] sm:$0xff] %v2273
        %2290 = vst [vmem:[%s259 + $0x78] sm:$0xff] %v2274
        %s2291 = sand.u32 %s134, 1
        %s2292 = scalar_lea.sflag [#allocation8], %s2291
        %s2293 = sand.u32 %s134, 1
        %s2294 = smul.addr %s2293, 128
        %s2295 = scalar_lea.vmem [#allocation12], %s2294
        // Predicated region
        $region53: #{self_attention_forward.1} parent=35 // pred_check
          %p2296 = pneg %p144
        $region54: #{self_attention_forward.1} parent=35 // pred_check_branch
          %2298 = sbr.rel (%p2296) target = $region56
        $region55: #{self_attention_forward.1} parent=35 // pred_region
          %s2299 = smul.u32 2, %s28
          %s2301 = ssub.s32 2048, 2048
          %2302 = vsyncadd %s2292, %s2301
          %s2303 = smul.addr %s27, 32
          %s2304 = sadd.s32 %s2299, %s2303
          %s2305 = smul.addr %s2304, 128
          %s2306 = scalar_lea.hbm %s4, %s2305
          %s2307 = sshll.u32 %s2295, 4
          %s2308 = int_to_ptr.vmem [resolvable:$true] %s2307
          %2313 = dma.vmem_to_hbm [thread:$0]  %s2308, 2048, %s2306, %s2292, 256, 512, 16
        $region56: #{self_attention_forward.1} parent=35 // pred_fallthru
          _
      $region36: #{self_attention_forward.1} parent=5 // pred_fallthru
        _
      %p2314 = scmp.le.s32.totalorder 2, %s18
      // Predicated region
      $region57: #{self_attention_forward.1} parent=5 // pred_check
        %p2315 = pneg %p2314
      $region58: #{self_attention_forward.1} parent=5 // pred_check_branch
        %2317 = sbr.rel (%p2315) target = $region60
      $region59: #{self_attention_forward.1} parent=5 // pred_region
        %s2318 = ssub.s32 %s18, 2
        // Predicated region
        $region61: #{self_attention_forward.1} parent=59 // pred_check
          %p2319 = pneg %p150
        $region62: #{self_attention_forward.1} parent=59 // pred_check_branch
          %2321 = sbr.rel (%p2319) target = $region64
        $region63: #{self_attention_forward.1} parent=59 // pred_region
          %s2322 = sand.u32 %s135, 1
          %s2323 = scalar_lea.sflag [#allocation8], %s2322
          %s2324 = sand.u32 %s135, 1
          %s2325 = smul.addr %s2324, 128
          %s2326 = scalar_lea.vmem [#allocation12], %s2325
          %2327 = dma.done %s2323, 2048
        $region64: #{self_attention_forward.1} parent=59 // pred_fallthru
          _
      $region60: #{self_attention_forward.1} parent=5 // pred_fallthru
        _
    $region6: #{self_attention_forward.1} parent=1 // loop_footer
      %s22 = sadd.s32 1, %s18
    $region7: #{self_attention_forward.1} parent=1 // loop_footer_branch
      %17 = sbr.rel target = $region3
    $region8: #{self_attention_forward.1} parent=1 // loop_exit
      _
    %2328 = vsyncpa [#allocation7], 1
    %s2329 = scalar_lea.sflag [#allocation7], 1
    %2330 = vsyncpa %s2329, 1
    %2331 = vsyncpa [#allocation10], 1
    %2332 = vsyncpa [#allocation8], 1
    %s2333 = scalar_lea.sflag [#allocation8], 1
    %2334 = vsyncpa %s2333, 1

</llo_original>
